<compile_context>
chip_gen: v5e
topology: v5e:2x2
jax: 0.10.0
libtpu: 0.0.40
codegen_flags: <defaults>
</compile_context>

<pallas_src>
import functools
import math

import jax
import jax.numpy as jnp
from jax import lax
from jax.experimental import pallas as pl
from jax.experimental.pallas import tpu as pltpu

PAD = 0


# ----------------------------- Pallas kernel --------------------------------

def _layer_norm(z, g, b, eps=1e-5):
    mu = jnp.mean(z, axis=-1, keepdims=True)
    var = jnp.mean((z - mu) ** 2, axis=-1, keepdims=True)
    return (z - mu) * lax.rsqrt(var + eps) * g + b


def fused_encoder_kernel(x0_ref, bias_ref,
                         wqkv_ref, bqkv_ref, wo_ref, bo_ref,
                         g1_ref, be1_ref, w1_ref, bf1_ref,
                         w2_ref, bf2_ref, g2_ref, be2_ref,
                         out_ref, x_carry,
                         *, n_head, batch, seq_len):
    """One grid step == one EncoderLayer applied to the whole (B*L, D) batch.

    The running activation lives in `x_carry` (VMEM scratch) across layer
    steps; every layer also writes its result into its own output block
    (the PyTorch module returns the list of ALL layer outputs).
    """
    layer = pl.program_id(0)

    @pl.when(layer == 0)
    def _():
        x_carry[...] = x0_ref[...]          # initial encoding (B*L, D) f32

    x = x_carry[...]                        # (B*L, D) f32
    BL, D = x.shape
    H, B, L = n_head, batch, seq_len
    dk = D // H
    Z = H * B                               # head-batch dim for attention

    # ---- head-batched fused Q/K/V projection --------------------------------
    # Weights prepped as (3*H, D, dk), head-major; 1/sqrt(dk) folded into Q.
    # Only leading-dim broadcasts / tile-aligned sublane splits (no lane
    # slicing, no stacks, no concats).
    xb3 = x.astype(jnp.bfloat16).reshape(B, L, D)
    x_z = jnp.broadcast_to(xb3[None], (3 * H, B, L, D)).reshape(3 * Z, L, D)
    w_z = jnp.broadcast_to(wqkv_ref[0][:, None],
                           (3 * H, B, D, dk)).reshape(3 * Z, D, dk)
    b_z = jnp.broadcast_to(bqkv_ref[0][:, None],
                           (3 * H, B, 1, dk)).reshape(3 * Z, 1, dk)
    qkv = jnp.einsum('znd,zdk->znk', x_z, w_z,
                     preferred_element_type=jnp.float32) + b_z    # (3Z, L, dk)
    q, k, v = qkv[:Z], qkv[Z:2 * Z], qkv[2 * Z:]                  # leading slices

    # ---- scaled-dot attention, all (head, batch) pairs in one batched matmul
    s = jnp.einsum('zqd,zkd->zqk', q, k,
                   preferred_element_type=jnp.float32)            # (Z, L, L)
    s = s + bias_ref[...]                   # additive -1e9 on PAD keys (layer-invariant)
    m = jnp.max(s, axis=-1, keepdims=True)
    p = jnp.exp(s - m)
    p = p * pl.reciprocal(jnp.sum(p, axis=-1, keepdims=True), approx=True)
    ctx = jnp.einsum('zqk,zkd->zqd', p, v,
                     preferred_element_type=jnp.float32)          # (Z, L, dk)

    # ---- output projection with the head-merge fused into wo ----------------
    # wo prepped as (H, dk, D); the MXU does the head merge, no concatenation.
    wo_z = jnp.broadcast_to(wo_ref[0][:, None], (H, B, dk, D)).reshape(Z, dk, D)
    attn_z = jnp.einsum('zqd,zde->zqe', ctx.astype(jnp.bfloat16), wo_z,
                        preferred_element_type=jnp.float32)       # (Z, L, D)
    attn = jnp.sum(attn_z.reshape(H, B, L, D), axis=0) + bo_ref[0]  # (B, L, D)

    # ---- residual + LayerNorm ------------------------------------------------
    x3 = x.reshape(B, L, D)
    # TODO(synk): dropout omitted (eval-mode forward; train-time dropout not applied).
    y1 = _layer_norm(attn + x3, g1_ref[0], be1_ref[0]).reshape(BL, D)

    # ---- position-wise FFN + residual + LayerNorm ----------------------------
    h1 = jnp.maximum(
        jnp.dot(y1.astype(jnp.bfloat16), w1_ref[0],
                preferred_element_type=jnp.float32) + bf1_ref[0], 0.0)
    h2 = jnp.dot(h1.astype(jnp.bfloat16), w2_ref[0],
                 preferred_element_type=jnp.float32) + bf2_ref[0]
    y2 = _layer_norm(h2 + y1, g2_ref[0], be2_ref[0])              # (BL, D)

    x_carry[...] = y2                       # carry to next layer step
    out_ref[0] = y2                         # per-layer output block


def _wspec(arr):
    """Stacked-weight BlockSpec: one layer slice per grid step."""
    nblk = arr.ndim - 1
    return pl.BlockSpec((1,) + arr.shape[1:],
                        lambda l, _n=nblk: (l,) + (0,) * _n)


def encoder_pallas(x0, bias_hb, stacked, n_head, batch, seq_len):
    BL, d_model = x0.shape
    n_enc = stacked[0].shape[0]
    Z = n_head * batch

    in_specs = ([pl.BlockSpec((BL, d_model), lambda l: (0, 0)),
                 pl.BlockSpec((Z, 1, seq_len), lambda l: (0, 0, 0))]
                + [_wspec(w) for w in stacked])

    return pl.pallas_call(
        functools.partial(fused_encoder_kernel, n_head=n_head,
                          batch=batch, seq_len=seq_len),
        out_shape=jax.ShapeDtypeStruct((n_enc, BL, d_model), jnp.float32),
        grid=(n_enc,),
        in_specs=in_specs,
        out_specs=pl.BlockSpec((1, BL, d_model), lambda l: (l, 0, 0)),
        scratch_shapes=[pltpu.VMEM((BL, d_model), jnp.float32)],
        compiler_params=pltpu.CompilerParams(
            dimension_semantics=("arbitrary",)),   # layer steps carry state
    )(x0, bias_hb, *stacked)


# ------------------------------ JAX glue -------------------------------------

def position_table(n_position, d_model):
    """Sinusoidal positional-encoding table; row PAD (=0) is zeroed."""
    pos = jnp.arange(n_position, dtype=jnp.float32)[:, None]
    i = jnp.arange(d_model, dtype=jnp.float32)[None, :]
    angle = pos / jnp.power(10000.0, 2.0 * jnp.floor(i / 2.0) / d_model)
    even = (jnp.arange(d_model) % 2) == 0
    tbl = jnp.where(even[None, :], jnp.sin(angle), jnp.cos(angle))
    return tbl.at[PAD].set(0.0)


def init_params(key, enc_vocab_size, max_word_len, n_enc, d_model, d_ff, n_head):
    n_position = max_word_len + 1
    k_ebd, k_layers = jax.random.split(key)
    enc_ebd = jax.random.uniform(k_ebd, (enc_vocab_size, d_model),
                                 jnp.float32, -0.1, 0.1)
    enc_ebd = enc_ebd.at[PAD].set(0.0)          # padding_idx row
    pos_ebd = position_table(n_position, d_model)

    def lin(k, fan_in, fan_out):
        bound = 1.0 / math.sqrt(fan_in)
        kw, kb = jax.random.split(k)
        w = jax.random.uniform(kw, (fan_in, fan_out), jnp.float32, -bound, bound)
        b = jax.random.uniform(kb, (1, fan_out), jnp.float32, -bound, bound)
        return w, b

    layers = []
    for lk in jax.random.split(k_layers, n_enc):
        ks = jax.random.split(lk, 6)
        wq, bq = lin(ks[0], d_model, d_model)
        wk, bk = lin(ks[1], d_model, d_model)
        wv, bv = lin(ks[2], d_model, d_model)
        wo, bo = lin(ks[3], d_model, d_model)
        w1, bf1 = lin(ks[4], d_model, d_ff)
        w2, bf2 = lin(ks[5], d_ff, d_model)
        layers.append(dict(
            wq=wq, bq=bq, wk=wk, bk=bk, wv=wv, bv=bv, wo=wo, bo=bo,
            g1=jnp.ones((1, d_model), jnp.float32),
            be1=jnp.zeros((1, d_model), jnp.float32),
            w1=w1, bf1=bf1, w2=w2, bf2=bf2,
            g2=jnp.ones((1, d_model), jnp.float32),
            be2=jnp.zeros((1, d_model), jnp.float32)))
    return dict(enc_ebd=enc_ebd, pos_ebd=pos_ebd, layers=layers)


def prepare_stacked_params(layers, n_head):
    """Stack per-layer weights on a leading layer axis, reorder Q/K/V and wo
    into head-major (3H, D, dk) / (H, dk, D) blocks so the kernel never has to
    slice along the lane axis, fold 1/sqrt(dk) into Q, and cast to bf16."""
    def stack(name):
        return jnp.stack([lp[name] for lp in layers], axis=0)

    wq, wk, wv = stack("wq"), stack("wk"), stack("wv")   # (n_enc, D, D)
    bq, bk, bv = stack("bq"), stack("bk"), stack("bv")   # (n_enc, 1, D)
    n_enc, d_model, _ = wq.shape
    dk = d_model // n_head
    scale = 1.0 / math.sqrt(dk)

    def heads_w(w):   # (n_enc, D, H*dk) -> (n_enc, H, D, dk)
        return w.reshape(n_enc, d_model, n_head, dk).transpose(0, 2, 1, 3)

    def heads_b(b):   # (n_enc, 1, H*dk) -> (n_enc, H, 1, dk)
        return b.reshape(n_enc, n_head, dk)[:, :, None, :]

    wqkv = jnp.concatenate([heads_w(wq) * scale, heads_w(wk), heads_w(wv)],
                           axis=1)                        # (n_enc, 3H, D, dk)
    bqkv = jnp.concatenate([heads_b(bq) * scale, heads_b(bk), heads_b(bv)],
                           axis=1)                        # (n_enc, 3H, 1, dk)
    wo_h = stack("wo").reshape(n_enc, n_head, dk, d_model)  # (n_enc, H, dk, D)

    bf16 = lambda a: a.astype(jnp.bfloat16)
    return [
        bf16(wqkv), bqkv,
        bf16(wo_h), stack("bo"),
        stack("g1"), stack("be1"),
        bf16(stack("w1")), stack("bf1"),
        bf16(stack("w2")), stack("bf2"),
        stack("g2"), stack("be2"),
    ]


def encoder_forward(params, input_ids, pos_ids, n_head):
    # Embedding lookups (gather) stay in plain JAX glue.
    encode = (jnp.take(params["enc_ebd"], input_ids, axis=0)
              + jnp.take(params["pos_ebd"], pos_ids, axis=0))          # (B, L, D)
    B, L, D = encode.shape
    n_enc = len(params["layers"])

    x0 = encode.reshape(B * L, D).astype(jnp.float32)
    # get_attn_padding_mask(input, input): additive bias, -1e9 on PAD keys.
    # Built once (layer-invariant), pre-expanded to the kernel's head-batch
    # layout z = head*B + b -> shape (H*B, 1, L).
    bias_bl = jnp.where(input_ids == PAD, jnp.float32(-1e9),
                        jnp.float32(0.0))[:, None, :]                   # (B, 1, L)
    bias_hb = jnp.broadcast_to(bias_bl[None],
                               (n_head, B, 1, L)).reshape(n_head * B, 1, L)

    stacked = prepare_stacked_params(params["layers"], n_head)
    out = encoder_pallas(x0, bias_hb, stacked, n_head, B, L)            # (n_enc, B*L, D)
    return [out[l].reshape(B, L, D) for l in range(n_enc)]


# ------------------------------- main ----------------------------------------

if __name__ == "__main__":
    enc_vocab_size, max_word_len = 50, 20
    n_enc, d_model, d_ff, n_head, dropout = 2, 32, 64, 4, 0.1
    B, L = 2, 8

    key = jax.random.PRNGKey(0)
    k_params, k_data = jax.random.split(key)
    params = init_params(k_params, enc_vocab_size, max_word_len,
                         n_enc, d_model, d_ff, n_head)

    input_ids = jax.random.randint(k_data, (B, L), 1, enc_vocab_size,
                                   dtype=jnp.int32)
    input_ids = input_ids.at[1, -2:].set(PAD)        # padded tail on item 1
    pos_ids = jnp.where(input_ids != PAD,
                        jnp.arange(1, L + 1, dtype=jnp.int32)[None, :], PAD)

    outs = encoder_forward(params, input_ids, pos_ids, n_head)
    outs = jax.block_until_ready(outs)

    assert len(outs) == n_enc
    assert all(o.shape == (B, L, d_model) for o in outs)
    assert all(bool(jnp.all(jnp.isfinite(o))) for o in outs)
    print("KERNEL_OK")
</pallas_src>

<mosaic_0001>
module attributes {stable_mosaic.version = 11 : i64} {
  func.func @fused_encoder_kernel(%arg0: i32, %arg1: memref<16x32xf32, #tpu.memory_space<vmem>>, %arg2: memref<8x1x8xf32, #tpu.memory_space<vmem>>, %arg3: memref<1x12x32x8xbf16, #tpu.memory_space<vmem>>, %arg4: memref<1x12x1x8xf32, #tpu.memory_space<vmem>>, %arg5: memref<1x4x8x32xbf16, #tpu.memory_space<vmem>>, %arg6: memref<1x1x32xf32, #tpu.memory_space<vmem>>, %arg7: memref<1x1x32xf32, #tpu.memory_space<vmem>>, %arg8: memref<1x1x32xf32, #tpu.memory_space<vmem>>, %arg9: memref<1x32x64xbf16, #tpu.memory_space<vmem>>, %arg10: memref<1x1x64xf32, #tpu.memory_space<vmem>>, %arg11: memref<1x64x32xbf16, #tpu.memory_space<vmem>>, %arg12: memref<1x1x32xf32, #tpu.memory_space<vmem>>, %arg13: memref<1x1x32xf32, #tpu.memory_space<vmem>>, %arg14: memref<1x1x32xf32, #tpu.memory_space<vmem>>, %arg15: memref<1x16x32xf32, #tpu.memory_space<vmem>>, %arg16: memref<16x32xf32, #tpu.memory_space<vmem>>) attributes {dimension_semantics = [#tpu.dimension_semantics<arbitrary>], iteration_bounds = array<i64: 2>, scalar_prefetch = 0 : i64, scratch_operands = 1 : i64, tpu.core_type = #tpu.core_type<tc>, window_params = [{pipeline_mode = #tpu.pipeline_mode<synchronous>, transform_indices = @transform_0, window_bounds = array<i64: 16, 32>}, {pipeline_mode = #tpu.pipeline_mode<synchronous>, transform_indices = @transform_1, window_bounds = array<i64: 8, 1, 8>}, {transform_indices = @transform_2, window_bounds = array<i64: 1, 12, 32, 8>}, {transform_indices = @transform_3, window_bounds = array<i64: 1, 12, 1, 8>}, {transform_indices = @transform_4, window_bounds = array<i64: 1, 4, 8, 32>}, {transform_indices = @transform_5, window_bounds = array<i64: 1, 1, 32>}, {transform_indices = @transform_6, window_bounds = array<i64: 1, 1, 32>}, {transform_indices = @transform_7, window_bounds = array<i64: 1, 1, 32>}, {transform_indices = @transform_8, window_bounds = array<i64: 1, 32, 64>}, {transform_indices = @transform_9, window_bounds = array<i64: 1, 1, 64>}, {transform_indices = @transform_10, window_bounds = array<i64: 1, 64, 32>}, {transform_indices = @transform_11, window_bounds = array<i64: 1, 1, 32>}, {transform_indices = @transform_12, window_bounds = array<i64: 1, 1, 32>}, {transform_indices = @transform_13, window_bounds = array<i64: 1, 1, 32>}, {transform_indices = @transform_14, window_bounds = array<i64: 1, 16, 32>}]} {
    %c0_i32 = arith.constant 0 : i32
    %0 = arith.cmpi eq, %arg0, %c0_i32 : i32
    %1 = arith.extui %0 : i1 to i32
    %c0_i32_0 = arith.constant 0 : i32
    %2 = arith.cmpi ne, %1, %c0_i32_0 : i32
    scf.if %2 {
      %c0_68 = arith.constant 0 : index
      %c0_69 = arith.constant 0 : index
      %138 = vector.load %arg1[%c0_68, %c0_69] : memref<16x32xf32, #tpu.memory_space<vmem>>, vector<16x32xf32>
      %c0_70 = arith.constant 0 : index
      %c0_71 = arith.constant 0 : index
      %139 = vector.load %arg16[%c0_70, %c0_71] : memref<16x32xf32, #tpu.memory_space<vmem>>, vector<16x32xf32>
      tpu.vector_store %arg16[%c0_70, %c0_71], %138 {strides = array<i32>} : memref<16x32xf32, #tpu.memory_space<vmem>>, vector<16x32xf32>,
    } else {
    }
    %c0 = arith.constant 0 : index
    %c0_1 = arith.constant 0 : index
    %3 = vector.load %arg16[%c0, %c0_1] : memref<16x32xf32, #tpu.memory_space<vmem>>, vector<16x32xf32>
    %4 = arith.truncf %3 : vector<16x32xf32> to vector<16x32xbf16>
    %5 = vector.shape_cast %4 : vector<16x32xbf16> to vector<2x8x32xbf16>
    %6 = vector.shape_cast %5 : vector<2x8x32xbf16> to vector<1x2x8x32xbf16>
    %7 = vector.shape_cast %6 : vector<1x2x8x32xbf16> to vector<1x2x8x32xbf16>
    %8 = vector.broadcast %7 : vector<1x2x8x32xbf16> to vector<12x2x8x32xbf16>
    %9 = vector.shape_cast %8 : vector<12x2x8x32xbf16> to vector<24x8x32xbf16>
    %c0_2 = arith.constant 0 : index
    %c0_3 = arith.constant 0 : index
    %c0_4 = arith.constant 0 : index
    %c0_5 = arith.constant 0 : index
    %10 = vector.load %arg3[%c0_2, %c0_3, %c0_4, %c0_5] : memref<1x12x32x8xbf16, #tpu.memory_space<vmem>>, vector<1x12x32x8xbf16>
    %11 = vector.shape_cast %10 : vector<1x12x32x8xbf16> to vector<12x32x8xbf16>
    %12 = vector.shape_cast %11 : vector<12x32x8xbf16> to vector<12x1x32x8xbf16>
    %13 = vector.shape_cast %12 : vector<12x1x32x8xbf16> to vector<12x1x32x8xbf16>
    %14 = vector.broadcast %13 : vector<12x1x32x8xbf16> to vector<12x2x32x8xbf16>
    %15 = vector.shape_cast %14 : vector<12x2x32x8xbf16> to vector<24x32x8xbf16>
    %c0_6 = arith.constant 0 : index
    %c0_7 = arith.constant 0 : index
    %c0_8 = arith.constant 0 : index
    %c0_9 = arith.constant 0 : index
    %16 = vector.load %arg4[%c0_6, %c0_7, %c0_8, %c0_9] : memref<1x12x1x8xf32, #tpu.memory_space<vmem>>, vector<1x12x1x8xf32>
    %17 = vector.shape_cast %16 : vector<1x12x1x8xf32> to vector<12x1x8xf32>
    %18 = vector.shape_cast %17 : vector<12x1x8xf32> to vector<12x1x1x8xf32>
    %19 = vector.shape_cast %18 : vector<12x1x1x8xf32> to vector<12x1x1x8xf32>
    %20 = vector.broadcast %19 : vector<12x1x1x8xf32> to vector<12x2x1x8xf32>
    %21 = vector.shape_cast %20 : vector<12x2x1x8xf32> to vector<24x1x8xf32>
    "tpu.trace_start"() <{level = 10 : i32, message = "znd,zdk->znk"}> : () -> ()
    %cst = arith.constant dense<0.000000e+00> : vector<24x8x8xf32>
    %22 = tpu.matmul %9, %15, %cst {dimension_numbers = #tpu.dot_dimension_numbers<[2], [1], [1], [2], [0, 0, 0, 1, 1, 2], [0], [0]>} : vector<24x8x32xbf16>, vector<24x32x8xbf16>, vector<24x8x8xf32> -> vector<24x8x8xf32>
    "tpu.trace_stop"() : () -> ()
    %23 = vector.broadcast %21 : vector<24x1x8xf32> to vector<24x8x8xf32>
    %24 = arith.addf %22, %23 : vector<24x8x8xf32>
    %25 = vector.extract_strided_slice %24 {offsets = [0, 0, 0], sizes = [8, 8, 8], strides = [1, 1, 1]} : vector<24x8x8xf32> to vector<8x8x8xf32>
    %26 = vector.extract_strided_slice %24 {offsets = [8, 0, 0], sizes = [8, 8, 8], strides = [1, 1, 1]} : vector<24x8x8xf32> to vector<8x8x8xf32>
    %27 = vector.extract_strided_slice %24 {offsets = [16, 0, 0], sizes = [8, 8, 8], strides = [1, 1, 1]} : vector<24x8x8xf32> to vector<8x8x8xf32>
    "tpu.trace_start"() <{level = 10 : i32, message = "zqd,zkd->zqk"}> : () -> ()
    %cst_10 = arith.constant dense<0.000000e+00> : vector<8x8x8xf32>
    %28 = tpu.matmul %25, %26, %cst_10 {dimension_numbers = #tpu.dot_dimension_numbers<[2], [2], [1], [1], [0, 0, 0, 1, 1, 1], [0], [0]>} : vector<8x8x8xf32>, vector<8x8x8xf32>, vector<8x8x8xf32> -> vector<8x8x8xf32>
    "tpu.trace_stop"() : () -> ()
    %c0_11 = arith.constant 0 : index
    %c0_12 = arith.constant 0 : index
    %c0_13 = arith.constant 0 : index
    %29 = vector.load %arg2[%c0_11, %c0_12, %c0_13] : memref<8x1x8xf32, #tpu.memory_space<vmem>>, vector<8x1x8xf32>
    %30 = vector.broadcast %29 : vector<8x1x8xf32> to vector<8x8x8xf32>
    %31 = arith.addf %28, %30 : vector<8x8x8xf32>
    %cst_14 = arith.constant dense<0xFF800000> : vector<8x8xf32>
    %32 = vector.multi_reduction <maximumf>, %31, %cst_14 [2] : vector<8x8x8xf32> to vector<8x8xf32>
    %33 = vector.shape_cast %32 : vector<8x8xf32> to vector<8x8x1xf32>
    %34 = vector.broadcast %33 : vector<8x8x1xf32> to vector<8x8x8xf32>
    %35 = arith.subf %31, %34 : vector<8x8x8xf32>
    %36 = math.exp %35 : vector<8x8x8xf32>
    %cst_15 = arith.constant dense<0.000000e+00> : vector<8x8xf32>
    %37 = vector.multi_reduction <add>, %36, %cst_15 [2] : vector<8x8x8xf32> to vector<8x8xf32>
    %38 = vector.shape_cast %37 : vector<8x8xf32> to vector<8x8x1xf32>
    %39 = tpu.reciprocal %38 {approx = true} : vector<8x8x1xf32> -> vector<8x8x1xf32>
    %40 = vector.broadcast %39 : vector<8x8x1xf32> to vector<8x8x8xf32>
    %41 = arith.mulf %36, %40 : vector<8x8x8xf32>
    "tpu.trace_start"() <{level = 10 : i32, message = "zqk,zkd->zqd"}> : () -> ()
    %cst_16 = arith.constant dense<0.000000e+00> : vector<8x8x8xf32>
    %42 = tpu.matmul %41, %27, %cst_16 {dimension_numbers = #tpu.dot_dimension_numbers<[2], [1], [1], [2], [0, 0, 0, 1, 1, 2], [0], [0]>} : vector<8x8x8xf32>, vector<8x8x8xf32>, vector<8x8x8xf32> -> vector<8x8x8xf32>
    "tpu.trace_stop"() : () -> ()
    %c0_17 = arith.constant 0 : index
    %c0_18 = arith.constant 0 : index
    %c0_19 = arith.constant 0 : index
    %c0_20 = arith.constant 0 : index
    %43 = vector.load %arg5[%c0_17, %c0_18, %c0_19, %c0_20] : memref<1x4x8x32xbf16, #tpu.memory_space<vmem>>, vector<1x4x8x32xbf16>
    %44 = vector.shape_cast %43 : vector<1x4x8x32xbf16> to vector<4x8x32xbf16>
    %45 = vector.shape_cast %44 : vector<4x8x32xbf16> to vector<4x1x8x32xbf16>
    %46 = vector.shape_cast %45 : vector<4x1x8x32xbf16> to vector<4x1x8x32xbf16>
    %47 = vector.broadcast %46 : vector<4x1x8x32xbf16> to vector<4x2x8x32xbf16>
    %48 = vector.shape_cast %47 : vector<4x2x8x32xbf16> to vector<8x8x32xbf16>
    %49 = arith.truncf %42 : vector<8x8x8xf32> to vector<8x8x8xbf16>
    "tpu.trace_start"() <{level = 10 : i32, message = "zqd,zde->zqe"}> : () -> ()
    %cst_21 = arith.constant dense<0.000000e+00> : vector<8x8x32xf32>
    %50 = tpu.matmul %49, %48, %cst_21 {dimension_numbers = #tpu.dot_dimension_numbers<[2], [1], [1], [2], [0, 0, 0, 1, 1, 2], [0], [0]>} : vector<8x8x8xbf16>, vector<8x8x32xbf16>, vector<8x8x32xf32> -> vector<8x8x32xf32>
    "tpu.trace_stop"() : () -> ()
    %51 = vector.shape_cast %50 : vector<8x8x32xf32> to vector<4x2x8x32xf32>
    %cst_22 = arith.constant dense<0.000000e+00> : vector<2x8x32xf32>
    %52 = vector.multi_reduction <add>, %51, %cst_22 [0] : vector<4x2x8x32xf32> to vector<2x8x32xf32>
    %c0_23 = arith.constant 0 : index
    %c0_24 = arith.constant 0 : index
    %c0_25 = arith.constant 0 : index
    %53 = vector.load %arg6[%c0_23, %c0_24, %c0_25] : memref<1x1x32xf32, #tpu.memory_space<vmem>>, vector<1x1x32xf32>
    %54 = vector.shape_cast %53 : vector<1x1x32xf32> to vector<1x32xf32>
    %55 = vector.shape_cast %54 : vector<1x32xf32> to vector<1x1x32xf32>
    %56 = vector.broadcast %55 : vector<1x1x32xf32> to vector<2x8x32xf32>
    %57 = arith.addf %52, %56 : vector<2x8x32xf32>
    %58 = vector.shape_cast %3 : vector<16x32xf32> to vector<2x8x32xf32>
    %59 = arith.addf %57, %58 : vector<2x8x32xf32>
    %c0_26 = arith.constant 0 : index
    %c0_27 = arith.constant 0 : index
    %c0_28 = arith.constant 0 : index
    %60 = vector.load %arg7[%c0_26, %c0_27, %c0_28] : memref<1x1x32xf32, #tpu.memory_space<vmem>>, vector<1x1x32xf32>
    %61 = vector.shape_cast %60 : vector<1x1x32xf32> to vector<1x32xf32>
    %c0_29 = arith.constant 0 : index
    %c0_30 = arith.constant 0 : index
    %c0_31 = arith.constant 0 : index
    %62 = vector.load %arg8[%c0_29, %c0_30, %c0_31] : memref<1x1x32xf32, #tpu.memory_space<vmem>>, vector<1x1x32xf32>
    %63 = vector.shape_cast %62 : vector<1x1x32xf32> to vector<1x32xf32>
    %cst_32 = arith.constant dense<0.000000e+00> : vector<2x8xf32>
    %64 = vector.multi_reduction <add>, %59, %cst_32 [2] : vector<2x8x32xf32> to vector<2x8xf32>
    %65 = vector.shape_cast %64 : vector<2x8xf32> to vector<2x8x1xf32>
    %cst_33 = arith.constant 3.200000e+01 : f32
    %66 = vector.broadcast %cst_33 : f32 to vector<2x8x1xf32>
    %67 = arith.divf %65, %66 : vector<2x8x1xf32>
    %68 = vector.broadcast %67 : vector<2x8x1xf32> to vector<2x8x32xf32>
    %69 = arith.subf %59, %68 : vector<2x8x32xf32>
    %70 = arith.mulf %69, %69 : vector<2x8x32xf32>
    %cst_34 = arith.constant dense<0.000000e+00> : vector<2x8xf32>
    %71 = vector.multi_reduction <add>, %70, %cst_34 [2] : vector<2x8x32xf32> to vector<2x8xf32>
    %72 = vector.shape_cast %71 : vector<2x8xf32> to vector<2x8x1xf32>
    %cst_35 = arith.constant 3.200000e+01 : f32
    %73 = vector.broadcast %cst_35 : f32 to vector<2x8x1xf32>
    %74 = arith.divf %72, %73 : vector<2x8x1xf32>
    %75 = vector.broadcast %67 : vector<2x8x1xf32> to vector<2x8x32xf32>
    %76 = arith.subf %59, %75 : vector<2x8x32xf32>
    %cst_36 = arith.constant 9.99999974E-6 : f32
    %77 = vector.broadcast %cst_36 : f32 to vector<2x8x1xf32>
    %78 = arith.addf %74, %77 : vector<2x8x1xf32>
    %79 = math.rsqrt %78 : vector<2x8x1xf32>
    %80 = vector.broadcast %79 : vector<2x8x1xf32> to vector<2x8x32xf32>
    %81 = arith.mulf %76, %80 : vector<2x8x32xf32>
    %82 = vector.shape_cast %61 : vector<1x32xf32> to vector<1x1x32xf32>
    %83 = vector.broadcast %82 : vector<1x1x32xf32> to vector<2x8x32xf32>
    %84 = arith.mulf %81, %83 : vector<2x8x32xf32>
    %85 = vector.shape_cast %63 : vector<1x32xf32> to vector<1x1x32xf32>
    %86 = vector.broadcast %85 : vector<1x1x32xf32> to vector<2x8x32xf32>
    %87 = arith.addf %84, %86 : vector<2x8x32xf32>
    %88 = vector.shape_cast %87 : vector<2x8x32xf32> to vector<16x32xf32>
    %89 = arith.truncf %88 : vector<16x32xf32> to vector<16x32xbf16>
    %c0_37 = arith.constant 0 : index
    %c0_38 = arith.constant 0 : index
    %c0_39 = arith.constant 0 : index
    %90 = vector.load %arg9[%c0_37, %c0_38, %c0_39] : memref<1x32x64xbf16, #tpu.memory_space<vmem>>, vector<1x32x64xbf16>
    %91 = vector.shape_cast %90 : vector<1x32x64xbf16> to vector<32x64xbf16>
    %cst_40 = arith.constant dense<0.000000e+00> : vector<16x64xf32>
    %92 = tpu.matmul %89, %91, %cst_40 {dimension_numbers = #tpu.dot_dimension_numbers<[1], [0], [0], [1], [0, 0, 1, 1], [], []>} : vector<16x32xbf16>, vector<32x64xbf16>, vector<16x64xf32> -> vector<16x64xf32>
    %c0_41 = arith.constant 0 : index
    %c0_42 = arith.constant 0 : index
    %c0_43 = arith.constant 0 : index
    %93 = vector.load %arg10[%c0_41, %c0_42, %c0_43] : memref<1x1x64xf32, #tpu.memory_space<vmem>>, vector<1x1x64xf32>
    %94 = vector.shape_cast %93 : vector<1x1x64xf32> to vector<1x64xf32>
    %95 = vector.broadcast %94 : vector<1x64xf32> to vector<16x64xf32>
    %96 = arith.addf %92, %95 : vector<16x64xf32>
    %cst_44 = arith.constant 0.000000e+00 : f32
    %97 = vector.broadcast %cst_44 : f32 to vector<16x64xf32>
    %98 = arith.maximumf %96, %97 : vector<16x64xf32>
    %99 = arith.truncf %98 : vector<16x64xf32> to vector<16x64xbf16>
    %c0_45 = arith.constant 0 : index
    %c0_46 = arith.constant 0 : index
    %c0_47 = arith.constant 0 : index
    %100 = vector.load %arg11[%c0_45, %c0_46, %c0_47] : memref<1x64x32xbf16, #tpu.memory_space<vmem>>, vector<1x64x32xbf16>
    %101 = vector.shape_cast %100 : vector<1x64x32xbf16> to vector<64x32xbf16>
    %cst_48 = arith.constant dense<0.000000e+00> : vector<16x32xf32>
    %102 = tpu.matmul %99, %101, %cst_48 {dimension_numbers = #tpu.dot_dimension_numbers<[1], [0], [0], [1], [0, 0, 1, 1], [], []>} : vector<16x64xbf16>, vector<64x32xbf16>, vector<16x32xf32> -> vector<16x32xf32>
    %c0_49 = arith.constant 0 : index
    %c0_50 = arith.constant 0 : index
    %c0_51 = arith.constant 0 : index
    %103 = vector.load %arg12[%c0_49, %c0_50, %c0_51] : memref<1x1x32xf32, #tpu.memory_space<vmem>>, vector<1x1x32xf32>
    %104 = vector.shape_cast %103 : vector<1x1x32xf32> to vector<1x32xf32>
    %105 = vector.broadcast %104 : vector<1x32xf32> to vector<16x32xf32>
    %106 = arith.addf %102, %105 : vector<16x32xf32>
    %107 = arith.addf %106, %88 : vector<16x32xf32>
    %c0_52 = arith.constant 0 : index
    %c0_53 = arith.constant 0 : index
    %c0_54 = arith.constant 0 : index
    %108 = vector.load %arg13[%c0_52, %c0_53, %c0_54] : memref<1x1x32xf32, #tpu.memory_space<vmem>>, vector<1x1x32xf32>
    %109 = vector.shape_cast %108 : vector<1x1x32xf32> to vector<1x32xf32>
    %c0_55 = arith.constant 0 : index
    %c0_56 = arith.constant 0 : index
    %c0_57 = arith.constant 0 : index
    %110 = vector.load %arg14[%c0_55, %c0_56, %c0_57] : memref<1x1x32xf32, #tpu.memory_space<vmem>>, vector<1x1x32xf32>
    %111 = vector.shape_cast %110 : vector<1x1x32xf32> to vector<1x32xf32>
    %cst_58 = arith.constant dense<0.000000e+00> : vector<16xf32>
    %112 = vector.multi_reduction <add>, %107, %cst_58 [1] : vector<16x32xf32> to vector<16xf32>
    %113 = vector.shape_cast %112 : vector<16xf32> to vector<16x1xf32>
    %cst_59 = arith.constant 3.200000e+01 : f32
    %114 = vector.broadcast %cst_59 : f32 to vector<16x1xf32>
    %115 = arith.divf %113, %114 : vector<16x1xf32>
    %116 = vector.broadcast %115 : vector<16x1xf32> to vector<16x32xf32>
    %117 = arith.subf %107, %116 : vector<16x32xf32>
    %118 = arith.mulf %117, %117 : vector<16x32xf32>
    %cst_60 = arith.constant dense<0.000000e+00> : vector<16xf32>
    %119 = vector.multi_reduction <add>, %118, %cst_60 [1] : vector<16x32xf32> to vector<16xf32>
    %120 = vector.shape_cast %119 : vector<16xf32> to vector<16x1xf32>
    %cst_61 = arith.constant 3.200000e+01 : f32
    %121 = vector.broadcast %cst_61 : f32 to vector<16x1xf32>
    %122 = arith.divf %120, %121 : vector<16x1xf32>
    %123 = vector.broadcast %115 : vector<16x1xf32> to vector<16x32xf32>
    %124 = arith.subf %107, %123 : vector<16x32xf32>
    %cst_62 = arith.constant 9.99999974E-6 : f32
    %125 = vector.broadcast %cst_62 : f32 to vector<16x1xf32>
    %126 = arith.addf %122, %125 : vector<16x1xf32>
    %127 = math.rsqrt %126 : vector<16x1xf32>
    %128 = vector.broadcast %127 : vector<16x1xf32> to vector<16x32xf32>
    %129 = arith.mulf %124, %128 : vector<16x32xf32>
    %130 = vector.broadcast %109 : vector<1x32xf32> to vector<16x32xf32>
    %131 = arith.mulf %129, %130 : vector<16x32xf32>
    %132 = vector.broadcast %111 : vector<1x32xf32> to vector<16x32xf32>
    %133 = arith.addf %131, %132 : vector<16x32xf32>
    %c0_63 = arith.constant 0 : index
    %c0_64 = arith.constant 0 : index
    %134 = vector.load %arg16[%c0_63, %c0_64] : memref<16x32xf32, #tpu.memory_space<vmem>>, vector<16x32xf32>
    tpu.vector_store %arg16[%c0_63, %c0_64], %133 {strides = array<i32>} : memref<16x32xf32, #tpu.memory_space<vmem>>, vector<16x32xf32>,
    %c0_65 = arith.constant 0 : index
    %c0_66 = arith.constant 0 : index
    %c0_67 = arith.constant 0 : index
    %135 = vector.load %arg15[%c0_65, %c0_66, %c0_67] : memref<1x16x32xf32, #tpu.memory_space<vmem>>, vector<1x16x32xf32>
    %136 = vector.shape_cast %135 : vector<1x16x32xf32> to vector<16x32xf32>
    %137 = vector.shape_cast %133 : vector<16x32xf32> to vector<1x16x32xf32>
    tpu.vector_store %arg15[%c0_65, %c0_66, %c0_67], %137 {strides = array<i32>} : memref<1x16x32xf32, #tpu.memory_space<vmem>>, vector<1x16x32xf32>,
    return
  }
  func.func @transform_0(%arg0: i32) -> (i32, i32) {
    %c0_i32 = arith.constant 0 : i32
    %c0_i32_0 = arith.constant 0 : i32
    %c0_i32_1 = arith.constant 0 : i32
    return %c0_i32, %c0_i32_0 : i32, i32
  }
  func.func @transform_1(%arg0: i32) -> (i32, i32, i32) {
    %c0_i32 = arith.constant 0 : i32
    %c0_i32_0 = arith.constant 0 : i32
    %c0_i32_1 = arith.constant 0 : i32
    %c0_i32_2 = arith.constant 0 : i32
    return %c0_i32, %c0_i32_0, %c0_i32_1 : i32, i32, i32
  }
  func.func @transform_2(%arg0: i32) -> (i32, i32, i32, i32) {
    %c0_i32 = arith.constant 0 : i32
    %c0_i32_0 = arith.constant 0 : i32
    %c0_i32_1 = arith.constant 0 : i32
    %c0_i32_2 = arith.constant 0 : i32
    return %arg0, %c0_i32, %c0_i32_0, %c0_i32_1 : i32, i32, i32, i32
  }
  func.func @transform_3(%arg0: i32) -> (i32, i32, i32, i32) {
    %c0_i32 = arith.constant 0 : i32
    %c0_i32_0 = arith.constant 0 : i32
    %c0_i32_1 = arith.constant 0 : i32
    %c0_i32_2 = arith.constant 0 : i32
    return %arg0, %c0_i32, %c0_i32_0, %c0_i32_1 : i32, i32, i32, i32
  }
  func.func @transform_4(%arg0: i32) -> (i32, i32, i32, i32) {
    %c0_i32 = arith.constant 0 : i32
    %c0_i32_0 = arith.constant 0 : i32
    %c0_i32_1 = arith.constant 0 : i32
    %c0_i32_2 = arith.constant 0 : i32
    return %arg0, %c0_i32, %c0_i32_0, %c0_i32_1 : i32, i32, i32, i32
  }
  func.func @transform_5(%arg0: i32) -> (i32, i32, i32) {
    %c0_i32 = arith.constant 0 : i32
    %c0_i32_0 = arith.constant 0 : i32
    %c0_i32_1 = arith.constant 0 : i32
    return %arg0, %c0_i32, %c0_i32_0 : i32, i32, i32
  }
  func.func @transform_6(%arg0: i32) -> (i32, i32, i32) {
    %c0_i32 = arith.constant 0 : i32
    %c0_i32_0 = arith.constant 0 : i32
    %c0_i32_1 = arith.constant 0 : i32
    return %arg0, %c0_i32, %c0_i32_0 : i32, i32, i32
  }
  func.func @transform_7(%arg0: i32) -> (i32, i32, i32) {
    %c0_i32 = arith.constant 0 : i32
    %c0_i32_0 = arith.constant 0 : i32
    %c0_i32_1 = arith.constant 0 : i32
    return %arg0, %c0_i32, %c0_i32_0 : i32, i32, i32
  }
  func.func @transform_8(%arg0: i32) -> (i32, i32, i32) {
    %c0_i32 = arith.constant 0 : i32
    %c0_i32_0 = arith.constant 0 : i32
    %c0_i32_1 = arith.constant 0 : i32
    return %arg0, %c0_i32, %c0_i32_0 : i32, i32, i32
  }
  func.func @transform_9(%arg0: i32) -> (i32, i32, i32) {
    %c0_i32 = arith.constant 0 : i32
    %c0_i32_0 = arith.constant 0 : i32
    %c0_i32_1 = arith.constant 0 : i32
    return %arg0, %c0_i32, %c0_i32_0 : i32, i32, i32
  }
  func.func @transform_10(%arg0: i32) -> (i32, i32, i32) {
    %c0_i32 = arith.constant 0 : i32
    %c0_i32_0 = arith.constant 0 : i32
    %c0_i32_1 = arith.constant 0 : i32
    return %arg0, %c0_i32, %c0_i32_0 : i32, i32, i32
  }
  func.func @transform_11(%arg0: i32) -> (i32, i32, i32) {
    %c0_i32 = arith.constant 0 : i32
    %c0_i32_0 = arith.constant 0 : i32
    %c0_i32_1 = arith.constant 0 : i32
    return %arg0, %c0_i32, %c0_i32_0 : i32, i32, i32
  }
  func.func @transform_12(%arg0: i32) -> (i32, i32, i32) {
    %c0_i32 = arith.constant 0 : i32
    %c0_i32_0 = arith.constant 0 : i32
    %c0_i32_1 = arith.constant 0 : i32
    return %arg0, %c0_i32, %c0_i32_0 : i32, i32, i32
  }
  func.func @transform_13(%arg0: i32) -> (i32, i32, i32) {
    %c0_i32 = arith.constant 0 : i32
    %c0_i32_0 = arith.constant 0 : i32
    %c0_i32_1 = arith.constant 0 : i32
    return %arg0, %c0_i32, %c0_i32_0 : i32, i32, i32
  }
  func.func @transform_14(%arg0: i32) -> (i32, i32, i32) {
    %c0_i32 = arith.constant 0 : i32
    %c0_i32_0 = arith.constant 0 : i32
    %c0_i32_1 = arith.constant 0 : i32
    return %arg0, %c0_i32, %c0_i32_0 : i32, i32, i32
  }
}

</mosaic_0001>

<llo_original>
// kernel: tpu_custom_call.1
$region0: #{tpu_custom_call.1}
  #allocation0 [shape = 'u32[]', space=smem, size = 0x4, offset = 0x4, fixed_abs, tag = 'smem constant byte address 0x4 - core index']
  #allocation1 [shape = 'u32[72,128]{1,0:T(1,128)}', space=vmem, size = 0x9000, scoped, tag = 'internal scratch']
  #allocation2 [shape = 'f32[16,32]{1,0:T(8,128)}', space=vmem, size = 0x2000, scoped, tag = 'scratch operand']
  %s0 = inlined_call_operand.vmem [shape: f32[16,32], index: 0, kind: input, shape index: {}]
  %s1 = inlined_call_operand.vmem [shape: f32[8,1,8], index: 1, kind: input, shape index: {}]
  %s2 = inlined_call_operand.vmem [shape: bf16[2,12,32,8], index: 2, kind: input, shape index: {}]
  %s3 = inlined_call_operand.vmem [shape: f32[2,12,1,8], index: 3, kind: input, shape index: {}]
  %s4 = inlined_call_operand.vmem [shape: bf16[2,4,8,32], index: 4, kind: input, shape index: {}]
  %s5 = inlined_call_operand.vmem [shape: f32[2,1,32], index: 5, kind: input, shape index: {}]
  %s6 = inlined_call_operand.vmem [shape: f32[2,1,32], index: 6, kind: input, shape index: {}]
  %s7 = inlined_call_operand.vmem [shape: f32[2,1,32], index: 7, kind: input, shape index: {}]
  %s8 = inlined_call_operand.vmem [shape: bf16[2,32,64], index: 8, kind: input, shape index: {}]
  %s9 = inlined_call_operand.vmem [shape: f32[2,1,64], index: 9, kind: input, shape index: {}]
  %s10 = inlined_call_operand.vmem [shape: bf16[2,64,32], index: 10, kind: input, shape index: {}]
  %s11 = inlined_call_operand.vmem [shape: f32[2,1,32], index: 11, kind: input, shape index: {}]
  %s12 = inlined_call_operand.vmem [shape: f32[2,1,32], index: 12, kind: input, shape index: {}]
  %s13 = inlined_call_operand.vmem [shape: f32[2,1,32], index: 13, kind: input, shape index: {}]
  %s14 = inlined_call_operand.hbm [shape: f32[2,16,32], index: 14, kind: output, shape index: {}]
  %s15 = sld [smem:[#allocation0]]
  $region93: #{tpu_custom_call.1} parent=0
    _
  %s17 = ssub.s32 1, %s15
  %s18 = scalar_select 0, %s17, %s15
  $region1: #{tpu_custom_call.1} parent=0
    #allocation3 [shape = 'u8[16384]{0}', space=vmem, size = 0x4000, scoped, tag = 'output window, operand 0']
    #allocation4 [shape = 's32[2]{0}', space=sflag, size = 0x8, scoped, tag = 'scoped memory for tpu_custom_call.1']
    %19 = vsyncpa [#allocation4], 0
    %s20 = scalar_lea.sflag [#allocation4], 1
    %21 = vsyncpa %s20, 0
    loop: start=0, step=1, limit=4
    $region2: #{tpu_custom_call.1} parent=1 // loop_pre_header
      _
    $region3: #{tpu_custom_call.1} parent=1 // loop_header
      %s23 = sphi 0, %s27
      %p24 = scmp.ge.s32.totalorder %s23, 4
      %s31 = sphi 0, %s31
      %s33 = sphi 0, %s31
      %s34 = sphi 0, %s33
      %s48 = sphi 0, %s34
      %s52 = sphi 0, %s52
      %s54 = sphi 0, %s52
      %s55 = sphi 0, %s54
      %s69 = sphi 0, %s55
      %s75 = sphi 0, %s77
      %s78 = sphi 0, %s75
      %s79 = sphi 0, %s78
      %s95 = sphi 0, %s79
      %s101 = sphi 0, %s103
      %s104 = sphi 0, %s101
      %s105 = sphi 0, %s104
      %s121 = sphi 0, %s105
      %s127 = sphi 0, %s129
      %s130 = sphi 0, %s127
      %s131 = sphi 0, %s130
      %s147 = sphi 0, %s131
      %s153 = sphi 0, %s155
      %s156 = sphi 0, %s153
      %s157 = sphi 0, %s156
      %s173 = sphi 0, %s157
      %s179 = sphi 0, %s181
      %s182 = sphi 0, %s179
      %s183 = sphi 0, %s182
      %s199 = sphi 0, %s183
      %s205 = sphi 0, %s207
      %s208 = sphi 0, %s205
      %s209 = sphi 0, %s208
      %s225 = sphi 0, %s209
      %s231 = sphi 0, %s233
      %s234 = sphi 0, %s231
      %s235 = sphi 0, %s234
      %s251 = sphi 0, %s235
      %s257 = sphi 0, %s259
      %s260 = sphi 0, %s257
      %s261 = sphi 0, %s260
      %s277 = sphi 0, %s261
      %s283 = sphi 0, %s285
      %s286 = sphi 0, %s283
      %s287 = sphi 0, %s286
      %s303 = sphi 0, %s287
      %s309 = sphi 0, %s311
      %s312 = sphi 0, %s309
      %s313 = sphi 0, %s312
      %s329 = sphi 0, %s313
      %s335 = sphi 0, %s337
      %s338 = sphi 0, %s335
      %s339 = sphi 0, %s338
      %s355 = sphi 0, %s339
      %s361 = sphi 0, %s363
      %s364 = sphi 0, %s361
      %s365 = sphi 0, %s364
      %s381 = sphi 0, %s365
      %s387 = sphi 0, %s389
      %s390 = sphi 0, %s387
      %s391 = sphi 0, %s390
      %s407 = sphi 0, %s391
    $region4: #{tpu_custom_call.1} parent=1 // loop_header_branch
      %26 = sbr.rel (%p24) target = $region8
    $region5: #{tpu_custom_call.1} parent=1 // loop_body
      %s28 = ssub.s32 %s23, 1
      %s29 = ssub.s32 %s23, 2
      %s30 = sadd.s32 %s23, 1
      %s32 = sadd.s32 %s31, 1
      %p35 = scmp.eq.s32.totalorder %s23, 1
      %p36 = scmp.ne.s32.totalorder %s31, %s33
      %p37 = scmp.eq.s32.totalorder %s23, 0
      %p38 = por %p36, %p37
      %p39 = scmp.ne.s32.totalorder %s31, %s33
      %p40 = scmp.eq.s32.totalorder %s28, 1
      %p41 = por %p39, %p40
      %p42 = scmp.ne.s32.totalorder %s33, %s34
      %p43 = scmp.eq.s32.totalorder %s28, 0
      %p44 = por %p42, %p43
      %p45 = scmp.ne.s32.totalorder %s33, %s34
      %p46 = scmp.eq.s32.totalorder %s29, 1
      %p47 = por %p45, %p46
      %p49 = scmp.ne.s32.totalorder %s34, %s48
      %p50 = scmp.eq.s32.totalorder %s29, 0
      %p51 = por %p49, %p50
      %s53 = sadd.s32 %s52, 1
      %p56 = scmp.eq.s32.totalorder %s23, 1
      %p57 = scmp.ne.s32.totalorder %s52, %s54
      %p58 = scmp.eq.s32.totalorder %s23, 0
      %p59 = por %p57, %p58
      %p60 = scmp.ne.s32.totalorder %s52, %s54
      %p61 = scmp.eq.s32.totalorder %s28, 1
      %p62 = por %p60, %p61
      %p63 = scmp.ne.s32.totalorder %s54, %s55
      %p64 = scmp.eq.s32.totalorder %s28, 0
      %p65 = por %p63, %p64
      %p66 = scmp.ne.s32.totalorder %s54, %s55
      %p67 = scmp.eq.s32.totalorder %s29, 1
      %p68 = por %p66, %p67
      %p70 = scmp.ne.s32.totalorder %s55, %s69
      %p71 = scmp.eq.s32.totalorder %s29, 0
      %p72 = por %p70, %p71
      %s73 = ssub.s32 %s23, %s30
      %p74 = scmp.eq.s32.totalorder %s73, 0
      %s76 = sadd.s32 %s75, 1
      %s77 = scalar_select %p74, %s75, %s76
      %p80 = pneg %p74
      %p81 = scmp.eq.s32.totalorder %s23, 1
      %p82 = por %p80, %p81
      %p83 = scmp.ne.s32.totalorder %s75, %s78
      %p84 = scmp.eq.s32.totalorder %s23, 0
      %p85 = por %p83, %p84
      %p86 = scmp.ne.s32.totalorder %s75, %s78
      %p87 = scmp.eq.s32.totalorder %s28, 1
      %p88 = por %p86, %p87
      %p89 = scmp.ne.s32.totalorder %s78, %s79
      %p90 = scmp.eq.s32.totalorder %s28, 0
      %p91 = por %p89, %p90
      %p92 = scmp.ne.s32.totalorder %s78, %s79
      %p93 = scmp.eq.s32.totalorder %s29, 1
      %p94 = por %p92, %p93
      %p96 = scmp.ne.s32.totalorder %s79, %s95
      %p97 = scmp.eq.s32.totalorder %s29, 0
      %p98 = por %p96, %p97
      %s99 = ssub.s32 %s23, %s30
      %p100 = scmp.eq.s32.totalorder %s99, 0
      %s102 = sadd.s32 %s101, 1
      %s103 = scalar_select %p100, %s101, %s102
      %p106 = pneg %p100
      %p107 = scmp.eq.s32.totalorder %s23, 1
      %p108 = por %p106, %p107
      %p109 = scmp.ne.s32.totalorder %s101, %s104
      %p110 = scmp.eq.s32.totalorder %s23, 0
      %p111 = por %p109, %p110
      %p112 = scmp.ne.s32.totalorder %s101, %s104
      %p113 = scmp.eq.s32.totalorder %s28, 1
      %p114 = por %p112, %p113
      %p115 = scmp.ne.s32.totalorder %s104, %s105
      %p116 = scmp.eq.s32.totalorder %s28, 0
      %p117 = por %p115, %p116
      %p118 = scmp.ne.s32.totalorder %s104, %s105
      %p119 = scmp.eq.s32.totalorder %s29, 1
      %p120 = por %p118, %p119
      %p122 = scmp.ne.s32.totalorder %s105, %s121
      %p123 = scmp.eq.s32.totalorder %s29, 0
      %p124 = por %p122, %p123
      %s125 = ssub.s32 %s23, %s30
      %p126 = scmp.eq.s32.totalorder %s125, 0
      %s128 = sadd.s32 %s127, 1
      %s129 = scalar_select %p126, %s127, %s128
      %p132 = pneg %p126
      %p133 = scmp.eq.s32.totalorder %s23, 1
      %p134 = por %p132, %p133
      %p135 = scmp.ne.s32.totalorder %s127, %s130
      %p136 = scmp.eq.s32.totalorder %s23, 0
      %p137 = por %p135, %p136
      %p138 = scmp.ne.s32.totalorder %s127, %s130
      %p139 = scmp.eq.s32.totalorder %s28, 1
      %p140 = por %p138, %p139
      %p141 = scmp.ne.s32.totalorder %s130, %s131
      %p142 = scmp.eq.s32.totalorder %s28, 0
      %p143 = por %p141, %p142
      %p144 = scmp.ne.s32.totalorder %s130, %s131
      %p145 = scmp.eq.s32.totalorder %s29, 1
      %p146 = por %p144, %p145
      %p148 = scmp.ne.s32.totalorder %s131, %s147
      %p149 = scmp.eq.s32.totalorder %s29, 0
      %p150 = por %p148, %p149
      %s151 = ssub.s32 %s23, %s30
      %p152 = scmp.eq.s32.totalorder %s151, 0
      %s154 = sadd.s32 %s153, 1
      %s155 = scalar_select %p152, %s153, %s154
      %p158 = pneg %p152
      %p159 = scmp.eq.s32.totalorder %s23, 1
      %p160 = por %p158, %p159
      %p161 = scmp.ne.s32.totalorder %s153, %s156
      %p162 = scmp.eq.s32.totalorder %s23, 0
      %p163 = por %p161, %p162
      %p164 = scmp.ne.s32.totalorder %s153, %s156
      %p165 = scmp.eq.s32.totalorder %s28, 1
      %p166 = por %p164, %p165
      %p167 = scmp.ne.s32.totalorder %s156, %s157
      %p168 = scmp.eq.s32.totalorder %s28, 0
      %p169 = por %p167, %p168
      %p170 = scmp.ne.s32.totalorder %s156, %s157
      %p171 = scmp.eq.s32.totalorder %s29, 1
      %p172 = por %p170, %p171
      %p174 = scmp.ne.s32.totalorder %s157, %s173
      %p175 = scmp.eq.s32.totalorder %s29, 0
      %p176 = por %p174, %p175
      %s177 = ssub.s32 %s23, %s30
      %p178 = scmp.eq.s32.totalorder %s177, 0
      %s180 = sadd.s32 %s179, 1
      %s181 = scalar_select %p178, %s179, %s180
      %p184 = pneg %p178
      %p185 = scmp.eq.s32.totalorder %s23, 1
      %p186 = por %p184, %p185
      %p187 = scmp.ne.s32.totalorder %s179, %s182
      %p188 = scmp.eq.s32.totalorder %s23, 0
      %p189 = por %p187, %p188
      %p190 = scmp.ne.s32.totalorder %s179, %s182
      %p191 = scmp.eq.s32.totalorder %s28, 1
      %p192 = por %p190, %p191
      %p193 = scmp.ne.s32.totalorder %s182, %s183
      %p194 = scmp.eq.s32.totalorder %s28, 0
      %p195 = por %p193, %p194
      %p196 = scmp.ne.s32.totalorder %s182, %s183
      %p197 = scmp.eq.s32.totalorder %s29, 1
      %p198 = por %p196, %p197
      %p200 = scmp.ne.s32.totalorder %s183, %s199
      %p201 = scmp.eq.s32.totalorder %s29, 0
      %p202 = por %p200, %p201
      %s203 = ssub.s32 %s23, %s30
      %p204 = scmp.eq.s32.totalorder %s203, 0
      %s206 = sadd.s32 %s205, 1
      %s207 = scalar_select %p204, %s205, %s206
      %p210 = pneg %p204
      %p211 = scmp.eq.s32.totalorder %s23, 1
      %p212 = por %p210, %p211
      %p213 = scmp.ne.s32.totalorder %s205, %s208
      %p214 = scmp.eq.s32.totalorder %s23, 0
      %p215 = por %p213, %p214
      %p216 = scmp.ne.s32.totalorder %s205, %s208
      %p217 = scmp.eq.s32.totalorder %s28, 1
      %p218 = por %p216, %p217
      %p219 = scmp.ne.s32.totalorder %s208, %s209
      %p220 = scmp.eq.s32.totalorder %s28, 0
      %p221 = por %p219, %p220
      %p222 = scmp.ne.s32.totalorder %s208, %s209
      %p223 = scmp.eq.s32.totalorder %s29, 1
      %p224 = por %p222, %p223
      %p226 = scmp.ne.s32.totalorder %s209, %s225
      %p227 = scmp.eq.s32.totalorder %s29, 0
      %p228 = por %p226, %p227
      %s229 = ssub.s32 %s23, %s30
      %p230 = scmp.eq.s32.totalorder %s229, 0
      %s232 = sadd.s32 %s231, 1
      %s233 = scalar_select %p230, %s231, %s232
      %p236 = pneg %p230
      %p237 = scmp.eq.s32.totalorder %s23, 1
      %p238 = por %p236, %p237
      %p239 = scmp.ne.s32.totalorder %s231, %s234
      %p240 = scmp.eq.s32.totalorder %s23, 0
      %p241 = por %p239, %p240
      %p242 = scmp.ne.s32.totalorder %s231, %s234
      %p243 = scmp.eq.s32.totalorder %s28, 1
      %p244 = por %p242, %p243
      %p245 = scmp.ne.s32.totalorder %s234, %s235
      %p246 = scmp.eq.s32.totalorder %s28, 0
      %p247 = por %p245, %p246
      %p248 = scmp.ne.s32.totalorder %s234, %s235
      %p249 = scmp.eq.s32.totalorder %s29, 1
      %p250 = por %p248, %p249
      %p252 = scmp.ne.s32.totalorder %s235, %s251
      %p253 = scmp.eq.s32.totalorder %s29, 0
      %p254 = por %p252, %p253
      %s255 = ssub.s32 %s23, %s30
      %p256 = scmp.eq.s32.totalorder %s255, 0
      %s258 = sadd.s32 %s257, 1
      %s259 = scalar_select %p256, %s257, %s258
      %p262 = pneg %p256
      %p263 = scmp.eq.s32.totalorder %s23, 1
      %p264 = por %p262, %p263
      %p265 = scmp.ne.s32.totalorder %s257, %s260
      %p266 = scmp.eq.s32.totalorder %s23, 0
      %p267 = por %p265, %p266
      %p268 = scmp.ne.s32.totalorder %s257, %s260
      %p269 = scmp.eq.s32.totalorder %s28, 1
      %p270 = por %p268, %p269
      %p271 = scmp.ne.s32.totalorder %s260, %s261
      %p272 = scmp.eq.s32.totalorder %s28, 0
      %p273 = por %p271, %p272
      %p274 = scmp.ne.s32.totalorder %s260, %s261
      %p275 = scmp.eq.s32.totalorder %s29, 1
      %p276 = por %p274, %p275
      %p278 = scmp.ne.s32.totalorder %s261, %s277
      %p279 = scmp.eq.s32.totalorder %s29, 0
      %p280 = por %p278, %p279
      %s281 = ssub.s32 %s23, %s30
      %p282 = scmp.eq.s32.totalorder %s281, 0
      %s284 = sadd.s32 %s283, 1
      %s285 = scalar_select %p282, %s283, %s284
      %p288 = pneg %p282
      %p289 = scmp.eq.s32.totalorder %s23, 1
      %p290 = por %p288, %p289
      %p291 = scmp.ne.s32.totalorder %s283, %s286
      %p292 = scmp.eq.s32.totalorder %s23, 0
      %p293 = por %p291, %p292
      %p294 = scmp.ne.s32.totalorder %s283, %s286
      %p295 = scmp.eq.s32.totalorder %s28, 1
      %p296 = por %p294, %p295
      %p297 = scmp.ne.s32.totalorder %s286, %s287
      %p298 = scmp.eq.s32.totalorder %s28, 0
      %p299 = por %p297, %p298
      %p300 = scmp.ne.s32.totalorder %s286, %s287
      %p301 = scmp.eq.s32.totalorder %s29, 1
      %p302 = por %p300, %p301
      %p304 = scmp.ne.s32.totalorder %s287, %s303
      %p305 = scmp.eq.s32.totalorder %s29, 0
      %p306 = por %p304, %p305
      %s307 = ssub.s32 %s23, %s30
      %p308 = scmp.eq.s32.totalorder %s307, 0
      %s310 = sadd.s32 %s309, 1
      %s311 = scalar_select %p308, %s309, %s310
      %p314 = pneg %p308
      %p315 = scmp.eq.s32.totalorder %s23, 1
      %p316 = por %p314, %p315
      %p317 = scmp.ne.s32.totalorder %s309, %s312
      %p318 = scmp.eq.s32.totalorder %s23, 0
      %p319 = por %p317, %p318
      %p320 = scmp.ne.s32.totalorder %s309, %s312
      %p321 = scmp.eq.s32.totalorder %s28, 1
      %p322 = por %p320, %p321
      %p323 = scmp.ne.s32.totalorder %s312, %s313
      %p324 = scmp.eq.s32.totalorder %s28, 0
      %p325 = por %p323, %p324
      %p326 = scmp.ne.s32.totalorder %s312, %s313
      %p327 = scmp.eq.s32.totalorder %s29, 1
      %p328 = por %p326, %p327
      %p330 = scmp.ne.s32.totalorder %s313, %s329
      %p331 = scmp.eq.s32.totalorder %s29, 0
      %p332 = por %p330, %p331
      %s333 = ssub.s32 %s23, %s30
      %p334 = scmp.eq.s32.totalorder %s333, 0
      %s336 = sadd.s32 %s335, 1
      %s337 = scalar_select %p334, %s335, %s336
      %p340 = pneg %p334
      %p341 = scmp.eq.s32.totalorder %s23, 1
      %p342 = por %p340, %p341
      %p343 = scmp.ne.s32.totalorder %s335, %s338
      %p344 = scmp.eq.s32.totalorder %s23, 0
      %p345 = por %p343, %p344
      %p346 = scmp.ne.s32.totalorder %s335, %s338
      %p347 = scmp.eq.s32.totalorder %s28, 1
      %p348 = por %p346, %p347
      %p349 = scmp.ne.s32.totalorder %s338, %s339
      %p350 = scmp.eq.s32.totalorder %s28, 0
      %p351 = por %p349, %p350
      %p352 = scmp.ne.s32.totalorder %s338, %s339
      %p353 = scmp.eq.s32.totalorder %s29, 1
      %p354 = por %p352, %p353
      %p356 = scmp.ne.s32.totalorder %s339, %s355
      %p357 = scmp.eq.s32.totalorder %s29, 0
      %p358 = por %p356, %p357
      %s359 = ssub.s32 %s23, %s30
      %p360 = scmp.eq.s32.totalorder %s359, 0
      %s362 = sadd.s32 %s361, 1
      %s363 = scalar_select %p360, %s361, %s362
      %p366 = pneg %p360
      %p367 = scmp.eq.s32.totalorder %s23, 1
      %p368 = por %p366, %p367
      %p369 = scmp.ne.s32.totalorder %s361, %s364
      %p370 = scmp.eq.s32.totalorder %s23, 0
      %p371 = por %p369, %p370
      %p372 = scmp.ne.s32.totalorder %s361, %s364
      %p373 = scmp.eq.s32.totalorder %s28, 1
      %p374 = por %p372, %p373
      %p375 = scmp.ne.s32.totalorder %s364, %s365
      %p376 = scmp.eq.s32.totalorder %s28, 0
      %p377 = por %p375, %p376
      %p378 = scmp.ne.s32.totalorder %s364, %s365
      %p379 = scmp.eq.s32.totalorder %s29, 1
      %p380 = por %p378, %p379
      %p382 = scmp.ne.s32.totalorder %s365, %s381
      %p383 = scmp.eq.s32.totalorder %s29, 0
      %p384 = por %p382, %p383
      %s385 = ssub.s32 %s23, %s30
      %p386 = scmp.eq.s32.totalorder %s385, 0
      %s388 = sadd.s32 %s387, 1
      %s389 = scalar_select %p386, %s387, %s388
      %p392 = pneg %p386
      %p393 = scmp.eq.s32.totalorder %s23, 1
      %p394 = por %p392, %p393
      %p395 = scmp.ne.s32.totalorder %s387, %s390
      %p396 = scmp.eq.s32.totalorder %s23, 0
      %p397 = por %p395, %p396
      %p398 = scmp.ne.s32.totalorder %s387, %s390
      %p399 = scmp.eq.s32.totalorder %s28, 1
      %p400 = por %p398, %p399
      %p401 = scmp.ne.s32.totalorder %s390, %s391
      %p402 = scmp.eq.s32.totalorder %s28, 0
      %p403 = por %p401, %p402
      %p404 = scmp.ne.s32.totalorder %s390, %s391
      %p405 = scmp.eq.s32.totalorder %s29, 1
      %p406 = por %p404, %p405
      %p408 = scmp.ne.s32.totalorder %s391, %s407
      %p409 = scmp.eq.s32.totalorder %s29, 0
      %p410 = por %p408, %p409
      %p411 = scmp.le.s32.totalorder 1, %s23
      %p412 = scmp.lt.s32.totalorder %s23, 3
      %p413 = pnand %p411, %p412
      %p414 = pneg %p413
      // Predicated region
      $region9: #{tpu_custom_call.1} parent=5 // pred_check
        _
      $region10: #{tpu_custom_call.1} parent=5 // pred_check_branch
        %416 = sbr.rel (%p413) target = $region12
      $region11: #{tpu_custom_call.1} parent=5 // pred_region
        %s417 = ssub.s32 %s23, 1
        // Predicated region
        $region13: #{tpu_custom_call.1} parent=11 // pred_check
          %p418 = pneg %p44
        $region14: #{tpu_custom_call.1} parent=11 // pred_check_branch
          %420 = sbr.rel (%p418) target = $region16
        $region15: #{tpu_custom_call.1} parent=11 // pred_region
          _
        $region16: #{tpu_custom_call.1} parent=11 // pred_fallthru
          _
        // Predicated region
        $region17: #{tpu_custom_call.1} parent=11 // pred_check
          %p421 = pneg %p65
        $region18: #{tpu_custom_call.1} parent=11 // pred_check_branch
          %423 = sbr.rel (%p421) target = $region20
        $region19: #{tpu_custom_call.1} parent=11 // pred_region
          _
        $region20: #{tpu_custom_call.1} parent=11 // pred_fallthru
          _
      $region12: #{tpu_custom_call.1} parent=5 // pred_fallthru
        _
      %p424 = scmp.lt.s32.totalorder %s23, 2
      // Predicated region
      $region21: #{tpu_custom_call.1} parent=5 // pred_check
        %p425 = pneg %p424
      $region22: #{tpu_custom_call.1} parent=5 // pred_check_branch
        %427 = sbr.rel (%p425) target = $region24
      $region23: #{tpu_custom_call.1} parent=5 // pred_region
        // Predicated region
        $region25: #{tpu_custom_call.1} parent=23 // pred_check
          %p428 = pneg %p85
        $region26: #{tpu_custom_call.1} parent=23 // pred_check_branch
          %430 = sbr.rel (%p428) target = $region28
        $region27: #{tpu_custom_call.1} parent=23 // pred_region
          %p431 = scmp.lt.s32.totalorder %s23, 1
          %s432 = scalar_select %p431, %s23, 1
          %s433 = smul.addr %s432, 48
          %s434 = smul.addr %s433, 4
          %s435 = scalar_lea.vmem %s2, %s434
        $region28: #{tpu_custom_call.1} parent=23 // pred_fallthru
          _
        // Predicated region
        $region29: #{tpu_custom_call.1} parent=23 // pred_check
          %p436 = pneg %p111
        $region30: #{tpu_custom_call.1} parent=23 // pred_check_branch
          %438 = sbr.rel (%p436) target = $region32
        $region31: #{tpu_custom_call.1} parent=23 // pred_region
          %p439 = scmp.lt.s32.totalorder %s23, 1
          %s440 = scalar_select %p439, %s23, 1
          %s441 = smul.addr %s440, 12
          %s442 = scalar_lea.vmem %s3, %s441
        $region32: #{tpu_custom_call.1} parent=23 // pred_fallthru
          _
        // Predicated region
        $region33: #{tpu_custom_call.1} parent=23 // pred_check
          %p443 = pneg %p137
        $region34: #{tpu_custom_call.1} parent=23 // pred_check_branch
          %445 = sbr.rel (%p443) target = $region36
        $region35: #{tpu_custom_call.1} parent=23 // pred_region
          %p446 = scmp.lt.s32.totalorder %s23, 1
          %s447 = scalar_select %p446, %s23, 1
          %s448 = smul.addr %s447, 4
          %s449 = smul.addr %s448, 4
          %s450 = scalar_lea.vmem %s4, %s449
        $region36: #{tpu_custom_call.1} parent=23 // pred_fallthru
          _
        // Predicated region
        $region37: #{tpu_custom_call.1} parent=23 // pred_check
          %p451 = pneg %p163
        $region38: #{tpu_custom_call.1} parent=23 // pred_check_branch
          %453 = sbr.rel (%p451) target = $region40
        $region39: #{tpu_custom_call.1} parent=23 // pred_region
          %p454 = scmp.lt.s32.totalorder %s23, 1
          %s455 = scalar_select %p454, %s23, 1
          %s456 = scalar_lea.vmem %s5, %s455
        $region40: #{tpu_custom_call.1} parent=23 // pred_fallthru
          _
        // Predicated region
        $region41: #{tpu_custom_call.1} parent=23 // pred_check
          %p457 = pneg %p189
        $region42: #{tpu_custom_call.1} parent=23 // pred_check_branch
          %459 = sbr.rel (%p457) target = $region44
        $region43: #{tpu_custom_call.1} parent=23 // pred_region
          %p460 = scmp.lt.s32.totalorder %s23, 1
          %s461 = scalar_select %p460, %s23, 1
          %s462 = scalar_lea.vmem %s6, %s461
        $region44: #{tpu_custom_call.1} parent=23 // pred_fallthru
          _
        // Predicated region
        $region45: #{tpu_custom_call.1} parent=23 // pred_check
          %p463 = pneg %p215
        $region46: #{tpu_custom_call.1} parent=23 // pred_check_branch
          %465 = sbr.rel (%p463) target = $region48
        $region47: #{tpu_custom_call.1} parent=23 // pred_region
          %p466 = scmp.lt.s32.totalorder %s23, 1
          %s467 = scalar_select %p466, %s23, 1
          %s468 = scalar_lea.vmem %s7, %s467
        $region48: #{tpu_custom_call.1} parent=23 // pred_fallthru
          _
        // Predicated region
        $region49: #{tpu_custom_call.1} parent=23 // pred_check
          %p469 = pneg %p241
        $region50: #{tpu_custom_call.1} parent=23 // pred_check_branch
          %471 = sbr.rel (%p469) target = $region52
        $region51: #{tpu_custom_call.1} parent=23 // pred_region
          %p472 = scmp.lt.s32.totalorder %s23, 1
          %s473 = scalar_select %p472, %s23, 1
          %s474 = smul.addr %s473, 4
          %s475 = smul.addr %s474, 4
          %s476 = scalar_lea.vmem %s8, %s475
        $region52: #{tpu_custom_call.1} parent=23 // pred_fallthru
          _
        // Predicated region
        $region53: #{tpu_custom_call.1} parent=23 // pred_check
          %p477 = pneg %p267
        $region54: #{tpu_custom_call.1} parent=23 // pred_check_branch
          %479 = sbr.rel (%p477) target = $region56
        $region55: #{tpu_custom_call.1} parent=23 // pred_region
          %p480 = scmp.lt.s32.totalorder %s23, 1
          %s481 = scalar_select %p480, %s23, 1
          %s482 = scalar_lea.vmem %s9, %s481
        $region56: #{tpu_custom_call.1} parent=23 // pred_fallthru
          _
        // Predicated region
        $region57: #{tpu_custom_call.1} parent=23 // pred_check
          %p483 = pneg %p293
        $region58: #{tpu_custom_call.1} parent=23 // pred_check_branch
          %485 = sbr.rel (%p483) target = $region60
        $region59: #{tpu_custom_call.1} parent=23 // pred_region
          %p486 = scmp.lt.s32.totalorder %s23, 1
          %s487 = scalar_select %p486, %s23, 1
          %s488 = smul.addr %s487, 8
          %s489 = smul.addr %s488, 4
          %s490 = scalar_lea.vmem %s10, %s489
        $region60: #{tpu_custom_call.1} parent=23 // pred_fallthru
          _
        // Predicated region
        $region61: #{tpu_custom_call.1} parent=23 // pred_check
          %p491 = pneg %p319
        $region62: #{tpu_custom_call.1} parent=23 // pred_check_branch
          %493 = sbr.rel (%p491) target = $region64
        $region63: #{tpu_custom_call.1} parent=23 // pred_region
          %p494 = scmp.lt.s32.totalorder %s23, 1
          %s495 = scalar_select %p494, %s23, 1
          %s496 = scalar_lea.vmem %s11, %s495
        $region64: #{tpu_custom_call.1} parent=23 // pred_fallthru
          _
        // Predicated region
        $region65: #{tpu_custom_call.1} parent=23 // pred_check
          %p497 = pneg %p345
        $region66: #{tpu_custom_call.1} parent=23 // pred_check_branch
          %499 = sbr.rel (%p497) target = $region68
        $region67: #{tpu_custom_call.1} parent=23 // pred_region
          %p500 = scmp.lt.s32.totalorder %s23, 1
          %s501 = scalar_select %p500, %s23, 1
          %s502 = scalar_lea.vmem %s12, %s501
        $region68: #{tpu_custom_call.1} parent=23 // pred_fallthru
          _
        // Predicated region
        $region69: #{tpu_custom_call.1} parent=23 // pred_check
          %p503 = pneg %p371
        $region70: #{tpu_custom_call.1} parent=23 // pred_check_branch
          %505 = sbr.rel (%p503) target = $region72
        $region71: #{tpu_custom_call.1} parent=23 // pred_region
          %p506 = scmp.lt.s32.totalorder %s23, 1
          %s507 = scalar_select %p506, %s23, 1
          %s508 = scalar_lea.vmem %s13, %s507
        $region72: #{tpu_custom_call.1} parent=23 // pred_fallthru
          _
      $region24: #{tpu_custom_call.1} parent=5 // pred_fallthru
        _
      %p509 = scmp.le.s32.totalorder 1, %s23
      %p510 = scmp.lt.s32.totalorder %s23, 3
      %p511 = pnand %p509, %p510
      %p512 = pneg %p511
      // Predicated region
      $region73: #{tpu_custom_call.1} parent=5 // pred_check
        _
      $region74: #{tpu_custom_call.1} parent=5 // pred_check_branch
        %514 = sbr.rel (%p511) target = $region76
      $region75: #{tpu_custom_call.1} parent=5 // pred_region
        %s515 = ssub.s32 %s23, 1
        %p516 = pneg %p44
        %p517 = pneg %p41
        %p518 = pneg %p65
        %p519 = pneg %p62
        %p520 = scmp.lt.s32.totalorder %s28, 1
        %s521 = scalar_select %p520, %s28, 1
        %s522 = smul.addr %s521, 48
        %s523 = smul.addr %s522, 4
        %s524 = scalar_lea.vmem %s2, %s523
        %p525 = pneg %p91
        %p526 = pneg %p88
        %p527 = scmp.lt.s32.totalorder %s28, 1
        %s528 = scalar_select %p527, %s28, 1
        %s529 = smul.addr %s528, 12
        %s530 = scalar_lea.vmem %s3, %s529
        %p531 = pneg %p117
        %p532 = pneg %p114
        %p533 = scmp.lt.s32.totalorder %s28, 1
        %s534 = scalar_select %p533, %s28, 1
        %s535 = smul.addr %s534, 4
        %s536 = smul.addr %s535, 4
        %s537 = scalar_lea.vmem %s4, %s536
        %p538 = pneg %p143
        %p539 = pneg %p140
        %p540 = scmp.lt.s32.totalorder %s28, 1
        %s541 = scalar_select %p540, %s28, 1
        %s542 = scalar_lea.vmem %s5, %s541
        %p543 = pneg %p169
        %p544 = pneg %p166
        %p545 = scmp.lt.s32.totalorder %s28, 1
        %s546 = scalar_select %p545, %s28, 1
        %s547 = scalar_lea.vmem %s6, %s546
        %p548 = pneg %p195
        %p549 = pneg %p192
        %p550 = scmp.lt.s32.totalorder %s28, 1
        %s551 = scalar_select %p550, %s28, 1
        %s552 = scalar_lea.vmem %s7, %s551
        %p553 = pneg %p221
        %p554 = pneg %p218
        %p555 = scmp.lt.s32.totalorder %s28, 1
        %s556 = scalar_select %p555, %s28, 1
        %s557 = smul.addr %s556, 4
        %s558 = smul.addr %s557, 4
        %s559 = scalar_lea.vmem %s8, %s558
        %p560 = pneg %p247
        %p561 = pneg %p244
        %p562 = scmp.lt.s32.totalorder %s28, 1
        %s563 = scalar_select %p562, %s28, 1
        %s564 = scalar_lea.vmem %s9, %s563
        %p565 = pneg %p273
        %p566 = pneg %p270
        %p567 = scmp.lt.s32.totalorder %s28, 1
        %s568 = scalar_select %p567, %s28, 1
        %s569 = smul.addr %s568, 8
        %s570 = smul.addr %s569, 4
        %s571 = scalar_lea.vmem %s10, %s570
        %p572 = pneg %p299
        %p573 = pneg %p296
        %p574 = scmp.lt.s32.totalorder %s28, 1
        %s575 = scalar_select %p574, %s28, 1
        %s576 = scalar_lea.vmem %s11, %s575
        %p577 = pneg %p325
        %p578 = pneg %p322
        %p579 = scmp.lt.s32.totalorder %s28, 1
        %s580 = scalar_select %p579, %s28, 1
        %s581 = scalar_lea.vmem %s12, %s580
        %p582 = pneg %p351
        %p583 = pneg %p348
        %p584 = scmp.lt.s32.totalorder %s28, 1
        %s585 = scalar_select %p584, %s28, 1
        %s586 = scalar_lea.vmem %s13, %s585
        %p587 = pneg %p377
        %p588 = pneg %p374
        %p589 = pneg %p403
        %p590 = pneg %p400
        %s591 = sand.u32 %s390, 1
        %s592 = scalar_lea.sflag [#allocation4], %s591
        %s593 = sand.u32 %s390, 1
        %s594 = smul.addr %s593, 16
        %s595 = scalar_lea.vmem [#allocation3], %s594
        %p596 = scmp.lt.s32.totalorder %s28, 1
        %s597 = scalar_select %p596, %s28, 1
        %s598 = smul.addr %s597, 48
        %s599 = smul.addr %s598, 4
        %s600 = scalar_lea.vmem %s2, %s599
        %p601 = scmp.lt.s32.totalorder %s28, 1
        %s602 = scalar_select %p601, %s28, 1
        %s603 = smul.addr %s602, 12
        %s604 = scalar_lea.vmem %s3, %s603
        %p605 = scmp.lt.s32.totalorder %s28, 1
        %s606 = scalar_select %p605, %s28, 1
        %s607 = smul.addr %s606, 4
        %s608 = smul.addr %s607, 4
        %s609 = scalar_lea.vmem %s4, %s608
        %p610 = scmp.lt.s32.totalorder %s28, 1
        %s611 = scalar_select %p610, %s28, 1
        %s612 = scalar_lea.vmem %s5, %s611
        %p613 = scmp.lt.s32.totalorder %s28, 1
        %s614 = scalar_select %p613, %s28, 1
        %s615 = scalar_lea.vmem %s6, %s614
        %p616 = scmp.lt.s32.totalorder %s28, 1
        %s617 = scalar_select %p616, %s28, 1
        %s618 = scalar_lea.vmem %s7, %s617
        %p619 = scmp.lt.s32.totalorder %s28, 1
        %s620 = scalar_select %p619, %s28, 1
        %s621 = smul.addr %s620, 4
        %s622 = smul.addr %s621, 4
        %s623 = scalar_lea.vmem %s8, %s622
        %p624 = scmp.lt.s32.totalorder %s28, 1
        %s625 = scalar_select %p624, %s28, 1
        %s626 = scalar_lea.vmem %s9, %s625
        %p627 = scmp.lt.s32.totalorder %s28, 1
        %s628 = scalar_select %p627, %s28, 1
        %s629 = smul.addr %s628, 8
        %s630 = smul.addr %s629, 4
        %s631 = scalar_lea.vmem %s10, %s630
        %p632 = scmp.lt.s32.totalorder %s28, 1
        %s633 = scalar_select %p632, %s28, 1
        %s634 = scalar_lea.vmem %s11, %s633
        %p635 = scmp.lt.s32.totalorder %s28, 1
        %s636 = scalar_select %p635, %s28, 1
        %s637 = scalar_lea.vmem %s12, %s636
        %p638 = scmp.lt.s32.totalorder %s28, 1
        %s639 = scalar_select %p638, %s28, 1
        %s640 = scalar_lea.vmem %s13, %s639
        %p642 = scmp.eq.s32.totalorder %s28, 0
        // Predicated region
        $region77: #{tpu_custom_call.1} parent=75 // pred_check
          %p643 = pneg %p642
        $region78: #{tpu_custom_call.1} parent=75 // pred_check_branch
          %645 = sbr.rel (%p643) target = $region80
        $region79: #{tpu_custom_call.1} parent=75 // pred_region
          %v646 = vld [vmem:[%s0] sm:$0xff]
          %v647 = vld [vmem:[%s0 + $0x8] sm:$0xff]
          %vm648 = vcmask 261120
          %649 = vst.msk [vmem:[#allocation2] sm:$0xff] %vm648, %v646
          %650 = vst.msk [vmem:[#allocation2 + $0x8] sm:$0xff] %vm648, %v647
        $region80: #{tpu_custom_call.1} parent=75 // pred_fallthru
          _
        %v651 = vld [vmem:[#allocation2] sm:$0xff]
        %v652 = vld [vmem:[#allocation2 + $0x8] sm:$0xff]
        %v653 = vpack.c.bf16 %v651, %v651
        %v654 = vpack.c.bf16 %v652, %v652
        %v655 = vld [vmem:[%s600] sm:$0xf]
        %v656 = vld [vmem:[%s600 + $0x4] sm:$0xf]
        %v657 = vld [vmem:[%s600 + $0x8] sm:$0xf]
        %v658 = vld [vmem:[%s600 + $0xc] sm:$0xf]
        %v659 = vld [vmem:[%s600 + $0x10] sm:$0xf]
        %v660 = vld [vmem:[%s600 + $0x14] sm:$0xf]
        %v661 = vld [vmem:[%s600 + $0x18] sm:$0xf]
        %v662 = vld [vmem:[%s600 + $0x1c] sm:$0xf]
        %v663 = vld [vmem:[%s600 + $0x20] sm:$0xf]
        %v664 = vld [vmem:[%s600 + $0x24] sm:$0xf]
        %v665 = vld [vmem:[%s600 + $0x28] sm:$0xf]
        %v666 = vld [vmem:[%s600 + $0x2c] sm:$0xf]
        %v667 = vld [vmem:[%s600 + $0x30] sm:$0xf]
        %v668 = vld [vmem:[%s600 + $0x34] sm:$0xf]
        %v669 = vld [vmem:[%s600 + $0x38] sm:$0xf]
        %v670 = vld [vmem:[%s600 + $0x3c] sm:$0xf]
        %v671 = vld [vmem:[%s600 + $0x40] sm:$0xf]
        %v672 = vld [vmem:[%s600 + $0x44] sm:$0xf]
        %v673 = vld [vmem:[%s600 + $0x48] sm:$0xf]
        %v674 = vld [vmem:[%s600 + $0x4c] sm:$0xf]
        %v675 = vld [vmem:[%s600 + $0x50] sm:$0xf]
        %v676 = vld [vmem:[%s600 + $0x54] sm:$0xf]
        %v677 = vld [vmem:[%s600 + $0x58] sm:$0xf]
        %v678 = vld [vmem:[%s600 + $0x5c] sm:$0xf]
        %v679 = vld [vmem:[%s600 + $0x60] sm:$0xf]
        %v680 = vld [vmem:[%s600 + $0x64] sm:$0xf]
        %v681 = vld [vmem:[%s600 + $0x68] sm:$0xf]
        %v682 = vld [vmem:[%s600 + $0x6c] sm:$0xf]
        %v683 = vld [vmem:[%s600 + $0x70] sm:$0xf]
        %v684 = vld [vmem:[%s600 + $0x74] sm:$0xf]
        %v685 = vld [vmem:[%s600 + $0x78] sm:$0xf]
        %v686 = vld [vmem:[%s600 + $0x7c] sm:$0xf]
        %v687 = vld [vmem:[%s600 + $0x80] sm:$0xf]
        %v688 = vld [vmem:[%s600 + $0x84] sm:$0xf]
        %v689 = vld [vmem:[%s600 + $0x88] sm:$0xf]
        %v690 = vld [vmem:[%s600 + $0x8c] sm:$0xf]
        %v691 = vld [vmem:[%s600 + $0x90] sm:$0xf]
        %v692 = vld [vmem:[%s600 + $0x94] sm:$0xf]
        %v693 = vld [vmem:[%s600 + $0x98] sm:$0xf]
        %v694 = vld [vmem:[%s600 + $0x9c] sm:$0xf]
        %v695 = vld [vmem:[%s600 + $0xa0] sm:$0xf]
        %v696 = vld [vmem:[%s600 + $0xa4] sm:$0xf]
        %v697 = vld [vmem:[%s600 + $0xa8] sm:$0xf]
        %v698 = vld [vmem:[%s600 + $0xac] sm:$0xf]
        %v699 = vld [vmem:[%s600 + $0xb0] sm:$0xf]
        %v700 = vld [vmem:[%s600 + $0xb4] sm:$0xf]
        %v701 = vld [vmem:[%s600 + $0xb8] sm:$0xf]
        %v702 = vld [vmem:[%s600 + $0xbc] sm:$0xf]
        %v703 = vld [vmem:[%s604] sm:$0x1]
        %v704 = vld [vmem:[%s604 + $0x1] sm:$0x1]
        %v705 = vld [vmem:[%s604 + $0x2] sm:$0x1]
        %v706 = vld [vmem:[%s604 + $0x3] sm:$0x1]
        %v707 = vld [vmem:[%s604 + $0x4] sm:$0x1]
        %v708 = vld [vmem:[%s604 + $0x5] sm:$0x1]
        %v709 = vld [vmem:[%s604 + $0x6] sm:$0x1]
        %v710 = vld [vmem:[%s604 + $0x7] sm:$0x1]
        %v711 = vld [vmem:[%s604 + $0x8] sm:$0x1]
        %v712 = vld [vmem:[%s604 + $0x9] sm:$0x1]
        %v713 = vld [vmem:[%s604 + $0xa] sm:$0x1]
        %v714 = vld [vmem:[%s604 + $0xb] sm:$0x1]
        %v727 = vperm.slane %v703, 0
        %v728 = vperm.slane %v704, 0
        %v729 = vperm.slane %v705, 0
        %v730 = vperm.slane %v706, 0
        %v731 = vperm.slane %v707, 0
        %v732 = vperm.slane %v708, 0
        %v733 = vperm.slane %v709, 0
        %v734 = vperm.slane %v710, 0
        %v735 = vperm.slane %v711, 0
        %v736 = vperm.slane %v712, 0
        %v737 = vperm.slane %v713, 0
        %v738 = vperm.slane %v714, 0
        %v755 = vunpack.c.l.b16 %v655
        %v756 = vunpack.c.l.b16 %v656
        %v757 = vunpack.c.l.b16 %v657
        %v758 = vunpack.c.l.b16 %v658
        %v759 = vpack.c.b16 %v756, %v755
        %v760 = vpack.c.b16 %v758, %v757
        %vm763 = vcmask 261120
        %v765 = vsel %vm763, %v653, 0
        %767 = vmatpush.bf16.msra.mxu0 0
        %768 = vmatpush.bf16.msra.mxu0 0
        %769 = vmatpush.bf16.msra.mxu0 0
        %770 = vmatpush.bf16.msra.mxu0 0
        %771 = vmatpush.bf16.msra.mxu0 0
        %772 = vmatpush.bf16.msra.mxu0 0
        %773 = vmatpush.bf16.msra.mxu0 %v760
        %774 = vmatpush.bf16.msra.mxu0 %v759
        %775 = vmatmul.bf16.gmra.mxu0 %v765
        %v776 = vpop.f32.mrf.mxu0
        %v777 = vadd.f32 %v727, %v776
        %v778 = vpop.f32.mrf.mxu0
        %779 = vdwg.mxu0
        %v781 = vsel %vm763, %v654, 0
        %783 = vmatpush.bf16.msra.mxu0 0
        %784 = vmatpush.bf16.msra.mxu0 0
        %785 = vmatpush.bf16.msra.mxu0 0
        %786 = vmatpush.bf16.msra.mxu0 0
        %787 = vmatpush.bf16.msra.mxu0 0
        %788 = vmatpush.bf16.msra.mxu0 0
        %789 = vmatpush.bf16.msra.mxu0 %v760
        %790 = vmatpush.bf16.msra.mxu0 %v759
        %791 = vmatmul.bf16.gmra.mxu0 %v781
        %v792 = vpop.f32.mrf.mxu0
        %v793 = vadd.f32 %v727, %v792
        %v794 = vpop.f32.mrf.mxu0
        %795 = vdwg.mxu0
        %v800 = vunpack.c.l.b16 %v659
        %v801 = vunpack.c.l.b16 %v660
        %v802 = vunpack.c.l.b16 %v661
        %v803 = vunpack.c.l.b16 %v662
        %v804 = vpack.c.b16 %v801, %v800
        %v805 = vpack.c.b16 %v803, %v802
        %808 = vmatpush.bf16.msra.mxu0 0
        %809 = vmatpush.bf16.msra.mxu0 0
        %810 = vmatpush.bf16.msra.mxu0 0
        %811 = vmatpush.bf16.msra.mxu0 0
        %812 = vmatpush.bf16.msra.mxu0 0
        %813 = vmatpush.bf16.msra.mxu0 0
        %814 = vmatpush.bf16.msra.mxu0 %v805
        %815 = vmatpush.bf16.msra.mxu0 %v804
        %816 = vmatmul.bf16.gmra.mxu0 %v765
        %v817 = vpop.f32.mrf.mxu0
        %v818 = vadd.f32 %v728, %v817
        %v819 = vpop.f32.mrf.mxu0
        %820 = vdwg.mxu0
        %821 = vmatpush.bf16.msra.mxu0 0
        %822 = vmatpush.bf16.msra.mxu0 0
        %823 = vmatpush.bf16.msra.mxu0 0
        %824 = vmatpush.bf16.msra.mxu0 0
        %825 = vmatpush.bf16.msra.mxu0 0
        %826 = vmatpush.bf16.msra.mxu0 0
        %827 = vmatpush.bf16.msra.mxu0 %v805
        %828 = vmatpush.bf16.msra.mxu0 %v804
        %829 = vmatmul.bf16.gmra.mxu0 %v781
        %v830 = vpop.f32.mrf.mxu0
        %v831 = vadd.f32 %v728, %v830
        %v832 = vpop.f32.mrf.mxu0
        %833 = vdwg.mxu0
        %v838 = vunpack.c.l.b16 %v663
        %v839 = vunpack.c.l.b16 %v664
        %v840 = vunpack.c.l.b16 %v665
        %v841 = vunpack.c.l.b16 %v666
        %v842 = vpack.c.b16 %v839, %v838
        %v843 = vpack.c.b16 %v841, %v840
        %846 = vmatpush.bf16.msra.mxu0 0
        %847 = vmatpush.bf16.msra.mxu0 0
        %848 = vmatpush.bf16.msra.mxu0 0
        %849 = vmatpush.bf16.msra.mxu0 0
        %850 = vmatpush.bf16.msra.mxu0 0
        %851 = vmatpush.bf16.msra.mxu0 0
        %852 = vmatpush.bf16.msra.mxu0 %v843
        %853 = vmatpush.bf16.msra.mxu0 %v842
        %854 = vmatmul.bf16.gmra.mxu0 %v765
        %v855 = vpop.f32.mrf.mxu0
        %v856 = vadd.f32 %v729, %v855
        %v857 = vpop.f32.mrf.mxu0
        %858 = vdwg.mxu0
        %859 = vmatpush.bf16.msra.mxu0 0
        %860 = vmatpush.bf16.msra.mxu0 0
        %861 = vmatpush.bf16.msra.mxu0 0
        %862 = vmatpush.bf16.msra.mxu0 0
        %863 = vmatpush.bf16.msra.mxu0 0
        %864 = vmatpush.bf16.msra.mxu0 0
        %865 = vmatpush.bf16.msra.mxu0 %v843
        %866 = vmatpush.bf16.msra.mxu0 %v842
        %867 = vmatmul.bf16.gmra.mxu0 %v781
        %v868 = vpop.f32.mrf.mxu0
        %v869 = vadd.f32 %v729, %v868
        %v870 = vpop.f32.mrf.mxu0
        %871 = vdwg.mxu0
        %v876 = vunpack.c.l.b16 %v667
        %v877 = vunpack.c.l.b16 %v668
        %v878 = vunpack.c.l.b16 %v669
        %v879 = vunpack.c.l.b16 %v670
        %v880 = vpack.c.b16 %v877, %v876
        %v881 = vpack.c.b16 %v879, %v878
        %884 = vmatpush.bf16.msra.mxu0 0
        %885 = vmatpush.bf16.msra.mxu0 0
        %886 = vmatpush.bf16.msra.mxu0 0
        %887 = vmatpush.bf16.msra.mxu0 0
        %888 = vmatpush.bf16.msra.mxu0 0
        %889 = vmatpush.bf16.msra.mxu0 0
        %890 = vmatpush.bf16.msra.mxu0 %v881
        %891 = vmatpush.bf16.msra.mxu0 %v880
        %892 = vmatmul.bf16.gmra.mxu0 %v765
        %v893 = vpop.f32.mrf.mxu0
        %v894 = vadd.f32 %v730, %v893
        %v895 = vpop.f32.mrf.mxu0
        %896 = vdwg.mxu0
        %897 = vmatpush.bf16.msra.mxu0 0
        %898 = vmatpush.bf16.msra.mxu0 0
        %899 = vmatpush.bf16.msra.mxu0 0
        %900 = vmatpush.bf16.msra.mxu0 0
        %901 = vmatpush.bf16.msra.mxu0 0
        %902 = vmatpush.bf16.msra.mxu0 0
        %903 = vmatpush.bf16.msra.mxu0 %v881
        %904 = vmatpush.bf16.msra.mxu0 %v880
        %905 = vmatmul.bf16.gmra.mxu0 %v781
        %v906 = vpop.f32.mrf.mxu0
        %v907 = vadd.f32 %v730, %v906
        %v908 = vpop.f32.mrf.mxu0
        %909 = vdwg.mxu0
        %v914 = vunpack.c.l.b16 %v671
        %v915 = vunpack.c.l.b16 %v672
        %v916 = vunpack.c.l.b16 %v673
        %v917 = vunpack.c.l.b16 %v674
        %v918 = vpack.c.b16 %v915, %v914
        %v919 = vpack.c.b16 %v917, %v916
        %922 = vmatpush.bf16.msra.mxu0 0
        %923 = vmatpush.bf16.msra.mxu0 0
        %924 = vmatpush.bf16.msra.mxu0 0
        %925 = vmatpush.bf16.msra.mxu0 0
        %926 = vmatpush.bf16.msra.mxu0 0
        %927 = vmatpush.bf16.msra.mxu0 0
        %928 = vmatpush.bf16.msra.mxu0 %v919
        %929 = vmatpush.bf16.msra.mxu0 %v918
        %930 = vmatmul.bf16.gmra.mxu0 %v765
        %v931 = vpop.f32.mrf.mxu0
        %v932 = vadd.f32 %v731, %v931
        %v933 = vpop.f32.mrf.mxu0
        %934 = vdwg.mxu0
        %935 = vmatpush.bf16.msra.mxu0 0
        %936 = vmatpush.bf16.msra.mxu0 0
        %937 = vmatpush.bf16.msra.mxu0 0
        %938 = vmatpush.bf16.msra.mxu0 0
        %939 = vmatpush.bf16.msra.mxu0 0
        %940 = vmatpush.bf16.msra.mxu0 0
        %941 = vmatpush.bf16.msra.mxu0 %v919
        %942 = vmatpush.bf16.msra.mxu0 %v918
        %943 = vmatmul.bf16.gmra.mxu0 %v781
        %v944 = vpop.f32.mrf.mxu0
        %v945 = vadd.f32 %v731, %v944
        %v946 = vpop.f32.mrf.mxu0
        %947 = vdwg.mxu0
        %v952 = vunpack.c.l.b16 %v675
        %v953 = vunpack.c.l.b16 %v676
        %v954 = vunpack.c.l.b16 %v677
        %v955 = vunpack.c.l.b16 %v678
        %v956 = vpack.c.b16 %v953, %v952
        %v957 = vpack.c.b16 %v955, %v954
        %960 = vmatpush.bf16.msra.mxu0 0
        %961 = vmatpush.bf16.msra.mxu0 0
        %962 = vmatpush.bf16.msra.mxu0 0
        %963 = vmatpush.bf16.msra.mxu0 0
        %964 = vmatpush.bf16.msra.mxu0 0
        %965 = vmatpush.bf16.msra.mxu0 0
        %966 = vmatpush.bf16.msra.mxu0 %v957
        %967 = vmatpush.bf16.msra.mxu0 %v956
        %968 = vmatmul.bf16.gmra.mxu0 %v765
        %v969 = vpop.f32.mrf.mxu0
        %v970 = vadd.f32 %v732, %v969
        %v971 = vpop.f32.mrf.mxu0
        %972 = vdwg.mxu0
        %973 = vmatpush.bf16.msra.mxu0 0
        %974 = vmatpush.bf16.msra.mxu0 0
        %975 = vmatpush.bf16.msra.mxu0 0
        %976 = vmatpush.bf16.msra.mxu0 0
        %977 = vmatpush.bf16.msra.mxu0 0
        %978 = vmatpush.bf16.msra.mxu0 0
        %979 = vmatpush.bf16.msra.mxu0 %v957
        %980 = vmatpush.bf16.msra.mxu0 %v956
        %981 = vmatmul.bf16.gmra.mxu0 %v781
        %v982 = vpop.f32.mrf.mxu0
        %v983 = vadd.f32 %v732, %v982
        %v984 = vpop.f32.mrf.mxu0
        %985 = vdwg.mxu0
        %v990 = vunpack.c.l.b16 %v679
        %v991 = vunpack.c.l.b16 %v680
        %v992 = vunpack.c.l.b16 %v681
        %v993 = vunpack.c.l.b16 %v682
        %v994 = vpack.c.b16 %v991, %v990
        %v995 = vpack.c.b16 %v993, %v992
        %998 = vmatpush.bf16.msra.mxu0 0
        %999 = vmatpush.bf16.msra.mxu0 0
        %1000 = vmatpush.bf16.msra.mxu0 0
        %1001 = vmatpush.bf16.msra.mxu0 0
        %1002 = vmatpush.bf16.msra.mxu0 0
        %1003 = vmatpush.bf16.msra.mxu0 0
        %1004 = vmatpush.bf16.msra.mxu0 %v995
        %1005 = vmatpush.bf16.msra.mxu0 %v994
        %1006 = vmatmul.bf16.gmra.mxu0 %v765
        %v1007 = vpop.f32.mrf.mxu0
        %v1008 = vadd.f32 %v733, %v1007
        %v1009 = vpop.f32.mrf.mxu0
        %1010 = vdwg.mxu0
        %1011 = vmatpush.bf16.msra.mxu0 0
        %1012 = vmatpush.bf16.msra.mxu0 0
        %1013 = vmatpush.bf16.msra.mxu0 0
        %1014 = vmatpush.bf16.msra.mxu0 0
        %1015 = vmatpush.bf16.msra.mxu0 0
        %1016 = vmatpush.bf16.msra.mxu0 0
        %1017 = vmatpush.bf16.msra.mxu0 %v995
        %1018 = vmatpush.bf16.msra.mxu0 %v994
        %1019 = vmatmul.bf16.gmra.mxu0 %v781
        %v1020 = vpop.f32.mrf.mxu0
        %v1021 = vadd.f32 %v733, %v1020
        %v1022 = vpop.f32.mrf.mxu0
        %1023 = vdwg.mxu0
        %v1028 = vunpack.c.l.b16 %v683
        %v1029 = vunpack.c.l.b16 %v684
        %v1030 = vunpack.c.l.b16 %v685
        %v1031 = vunpack.c.l.b16 %v686
        %v1032 = vpack.c.b16 %v1029, %v1028
        %v1033 = vpack.c.b16 %v1031, %v1030
        %1036 = vmatpush.bf16.msra.mxu0 0
        %1037 = vmatpush.bf16.msra.mxu0 0
        %1038 = vmatpush.bf16.msra.mxu0 0
        %1039 = vmatpush.bf16.msra.mxu0 0
        %1040 = vmatpush.bf16.msra.mxu0 0
        %1041 = vmatpush.bf16.msra.mxu0 0
        %1042 = vmatpush.bf16.msra.mxu0 %v1033
        %1043 = vmatpush.bf16.msra.mxu0 %v1032
        %1044 = vmatmul.bf16.gmra.mxu0 %v765
        %v1045 = vpop.f32.mrf.mxu0
        %v1046 = vadd.f32 %v734, %v1045
        %v1047 = vpop.f32.mrf.mxu0
        %1048 = vdwg.mxu0
        %1049 = vmatpush.bf16.msra.mxu0 0
        %1050 = vmatpush.bf16.msra.mxu0 0
        %1051 = vmatpush.bf16.msra.mxu0 0
        %1052 = vmatpush.bf16.msra.mxu0 0
        %1053 = vmatpush.bf16.msra.mxu0 0
        %1054 = vmatpush.bf16.msra.mxu0 0
        %1055 = vmatpush.bf16.msra.mxu0 %v1033
        %1056 = vmatpush.bf16.msra.mxu0 %v1032
        %1057 = vmatmul.bf16.gmra.mxu0 %v781
        %v1058 = vpop.f32.mrf.mxu0
        %v1059 = vadd.f32 %v734, %v1058
        %v1060 = vpop.f32.mrf.mxu0
        %1061 = vdwg.mxu0
        %v1066 = vunpack.c.l.b16 %v687
        %v1067 = vunpack.c.l.b16 %v688
        %v1068 = vunpack.c.l.b16 %v689
        %v1069 = vunpack.c.l.b16 %v690
        %v1070 = vpack.c.b16 %v1067, %v1066
        %v1071 = vpack.c.b16 %v1069, %v1068
        %1074 = vmatpush.bf16.msra.mxu0 0
        %1075 = vmatpush.bf16.msra.mxu0 0
        %1076 = vmatpush.bf16.msra.mxu0 0
        %1077 = vmatpush.bf16.msra.mxu0 0
        %1078 = vmatpush.bf16.msra.mxu0 0
        %1079 = vmatpush.bf16.msra.mxu0 0
        %1080 = vmatpush.bf16.msra.mxu0 %v1071
        %1081 = vmatpush.bf16.msra.mxu0 %v1070
        %1082 = vmatmul.bf16.gmra.mxu0 %v765
        %v1083 = vpop.f32.mrf.mxu0
        %v1084 = vadd.f32 %v735, %v1083
        %v1085 = vpop.f32.mrf.mxu0
        %1086 = vdwg.mxu0
        %1087 = vmatpush.bf16.msra.mxu0 0
        %1088 = vmatpush.bf16.msra.mxu0 0
        %1089 = vmatpush.bf16.msra.mxu0 0
        %1090 = vmatpush.bf16.msra.mxu0 0
        %1091 = vmatpush.bf16.msra.mxu0 0
        %1092 = vmatpush.bf16.msra.mxu0 0
        %1093 = vmatpush.bf16.msra.mxu0 %v1071
        %1094 = vmatpush.bf16.msra.mxu0 %v1070
        %1095 = vmatmul.bf16.gmra.mxu0 %v781
        %v1096 = vpop.f32.mrf.mxu0
        %v1097 = vadd.f32 %v735, %v1096
        %v1098 = vpop.f32.mrf.mxu0
        %1099 = vdwg.mxu0
        %v1104 = vunpack.c.l.b16 %v691
        %v1105 = vunpack.c.l.b16 %v692
        %v1106 = vunpack.c.l.b16 %v693
        %v1107 = vunpack.c.l.b16 %v694
        %v1108 = vpack.c.b16 %v1105, %v1104
        %v1109 = vpack.c.b16 %v1107, %v1106
        %1112 = vmatpush.bf16.msra.mxu0 0
        %1113 = vmatpush.bf16.msra.mxu0 0
        %1114 = vmatpush.bf16.msra.mxu0 0
        %1115 = vmatpush.bf16.msra.mxu0 0
        %1116 = vmatpush.bf16.msra.mxu0 0
        %1117 = vmatpush.bf16.msra.mxu0 0
        %1118 = vmatpush.bf16.msra.mxu0 %v1109
        %1119 = vmatpush.bf16.msra.mxu0 %v1108
        %1120 = vmatmul.bf16.gmra.mxu0 %v765
        %v1121 = vpop.f32.mrf.mxu0
        %v1122 = vadd.f32 %v736, %v1121
        %v1123 = vpop.f32.mrf.mxu0
        %1124 = vdwg.mxu0
        %1125 = vmatpush.bf16.msra.mxu0 0
        %1126 = vmatpush.bf16.msra.mxu0 0
        %1127 = vmatpush.bf16.msra.mxu0 0
        %1128 = vmatpush.bf16.msra.mxu0 0
        %1129 = vmatpush.bf16.msra.mxu0 0
        %1130 = vmatpush.bf16.msra.mxu0 0
        %1131 = vmatpush.bf16.msra.mxu0 %v1109
        %1132 = vmatpush.bf16.msra.mxu0 %v1108
        %1133 = vmatmul.bf16.gmra.mxu0 %v781
        %v1134 = vpop.f32.mrf.mxu0
        %v1135 = vadd.f32 %v736, %v1134
        %v1136 = vpop.f32.mrf.mxu0
        %1137 = vdwg.mxu0
        %v1142 = vunpack.c.l.b16 %v695
        %v1143 = vunpack.c.l.b16 %v696
        %v1144 = vunpack.c.l.b16 %v697
        %v1145 = vunpack.c.l.b16 %v698
        %v1146 = vpack.c.b16 %v1143, %v1142
        %v1147 = vpack.c.b16 %v1145, %v1144
        %1150 = vmatpush.bf16.msra.mxu0 0
        %1151 = vmatpush.bf16.msra.mxu0 0
        %1152 = vmatpush.bf16.msra.mxu0 0
        %1153 = vmatpush.bf16.msra.mxu0 0
        %1154 = vmatpush.bf16.msra.mxu0 0
        %1155 = vmatpush.bf16.msra.mxu0 0
        %1156 = vmatpush.bf16.msra.mxu0 %v1147
        %1157 = vmatpush.bf16.msra.mxu0 %v1146
        %1158 = vmatmul.bf16.gmra.mxu0 %v765
        %v1159 = vpop.f32.mrf.mxu0
        %v1160 = vadd.f32 %v737, %v1159
        %v1161 = vpop.f32.mrf.mxu0
        %1162 = vdwg.mxu0
        %1163 = vmatpush.bf16.msra.mxu0 0
        %1164 = vmatpush.bf16.msra.mxu0 0
        %1165 = vmatpush.bf16.msra.mxu0 0
        %1166 = vmatpush.bf16.msra.mxu0 0
        %1167 = vmatpush.bf16.msra.mxu0 0
        %1168 = vmatpush.bf16.msra.mxu0 0
        %1169 = vmatpush.bf16.msra.mxu0 %v1147
        %1170 = vmatpush.bf16.msra.mxu0 %v1146
        %1171 = vmatmul.bf16.gmra.mxu0 %v781
        %v1172 = vpop.f32.mrf.mxu0
        %v1173 = vadd.f32 %v737, %v1172
        %v1174 = vpop.f32.mrf.mxu0
        %1175 = vdwg.mxu0
        %v1180 = vunpack.c.l.b16 %v699
        %v1181 = vunpack.c.l.b16 %v700
        %v1182 = vunpack.c.l.b16 %v701
        %v1183 = vunpack.c.l.b16 %v702
        %v1184 = vpack.c.b16 %v1181, %v1180
        %v1185 = vpack.c.b16 %v1183, %v1182
        %1188 = vmatpush.bf16.msra.mxu0 0
        %1189 = vmatpush.bf16.msra.mxu0 0
        %1190 = vmatpush.bf16.msra.mxu0 0
        %1191 = vmatpush.bf16.msra.mxu0 0
        %1192 = vmatpush.bf16.msra.mxu0 0
        %1193 = vmatpush.bf16.msra.mxu0 0
        %1194 = vmatpush.bf16.msra.mxu0 %v1185
        %1195 = vmatpush.bf16.msra.mxu0 %v1184
        %1196 = vmatmul.bf16.gmra.mxu0 %v765
        %v1197 = vpop.f32.mrf.mxu0
        %v1198 = vadd.f32 %v738, %v1197
        %v1199 = vpop.f32.mrf.mxu0
        %1200 = vdwg.mxu0
        %1201 = vmatpush.bf16.msra.mxu0 0
        %1202 = vmatpush.bf16.msra.mxu0 0
        %1203 = vmatpush.bf16.msra.mxu0 0
        %1204 = vmatpush.bf16.msra.mxu0 0
        %1205 = vmatpush.bf16.msra.mxu0 0
        %1206 = vmatpush.bf16.msra.mxu0 0
        %1207 = vmatpush.bf16.msra.mxu0 %v1185
        %1208 = vmatpush.bf16.msra.mxu0 %v1184
        %1209 = vmatmul.bf16.gmra.mxu0 %v781
        %v1210 = vpop.f32.mrf.mxu0
        %v1211 = vadd.f32 %v738, %v1210
        %v1212 = vpop.f32.mrf.mxu0
        %1213 = vdwg.mxu0
        %v1214 = vld [vmem:[%s1] sm:$0x1]
        %v1215 = vld [vmem:[%s1 + $0x1] sm:$0x1]
        %v1216 = vld [vmem:[%s1 + $0x2] sm:$0x1]
        %v1217 = vld [vmem:[%s1 + $0x3] sm:$0x1]
        %v1218 = vld [vmem:[%s1 + $0x4] sm:$0x1]
        %v1219 = vld [vmem:[%s1 + $0x5] sm:$0x1]
        %v1220 = vld [vmem:[%s1 + $0x6] sm:$0x1]
        %v1221 = vld [vmem:[%s1 + $0x7] sm:$0x1]
        %v1230 = vperm.slane %v1214, 0
        %v1231 = vperm.slane %v1215, 0
        %v1232 = vperm.slane %v1216, 0
        %v1233 = vperm.slane %v1217, 0
        %v1234 = vperm.slane %v1218, 0
        %v1235 = vperm.slane %v1219, 0
        %v1236 = vperm.slane %v1220, 0
        %v1237 = vperm.slane %v1221, 0
        %vm1246 = vcmask 64512
        %v1248 = vsel %vm1246, %v777, 0
        %v1251 = vsel %vm1246, %v932, 0
        %1253 = vmatpush.xpose.msra.mxu0 0.0
        %1254 = vmatpush.xpose.msra.mxu0 0.0
        %1255 = vmatpush.xpose.msra.mxu0 0.0
        %1256 = vmatpush.xpose.msra.mxu0 0.0
        %1257 = vmatpush.xpose.msra.mxu0 0.0
        %1258 = vmatpush.xpose.msra.mxu0 0.0
        %1259 = vmatpush.xpose.msra.mxu0 0.0
        %1260 = vmatpush.xpose.msra.mxu0 0.0
        %1261 = vmatpush.xpose.msra.mxu0 0.0
        %1262 = vmatpush.xpose.msra.mxu0 0.0
        %1263 = vmatpush.xpose.msra.mxu0 0.0
        %1264 = vmatpush.xpose.msra.mxu0 0.0
        %1265 = vmatpush.xpose.msra.mxu0 0.0
        %1266 = vmatpush.xpose.msra.mxu0 0.0
        %1267 = vmatpush.xpose.msra.mxu0 0.0
        %1268 = vmatpush.xpose.msra.mxu0 %v1251
        %1269 = vmatmul.f32.gmra.mxu0 %v1248
        %v1270 = vpop.f32.mrf.mxu0
        %v1271 = vadd.f32 %v1230, %v1270
        %1272 = vdwg.mxu0
        %v1274 = vsel %vm1246, %v793, 0
        %v1277 = vsel %vm1246, %v945, 0
        %1279 = vmatpush.xpose.msra.mxu0 0.0
        %1280 = vmatpush.xpose.msra.mxu0 0.0
        %1281 = vmatpush.xpose.msra.mxu0 0.0
        %1282 = vmatpush.xpose.msra.mxu0 0.0
        %1283 = vmatpush.xpose.msra.mxu0 0.0
        %1284 = vmatpush.xpose.msra.mxu0 0.0
        %1285 = vmatpush.xpose.msra.mxu0 0.0
        %1286 = vmatpush.xpose.msra.mxu0 0.0
        %1287 = vmatpush.xpose.msra.mxu0 0.0
        %1288 = vmatpush.xpose.msra.mxu0 0.0
        %1289 = vmatpush.xpose.msra.mxu0 0.0
        %1290 = vmatpush.xpose.msra.mxu0 0.0
        %1291 = vmatpush.xpose.msra.mxu0 0.0
        %1292 = vmatpush.xpose.msra.mxu0 0.0
        %1293 = vmatpush.xpose.msra.mxu0 0.0
        %1294 = vmatpush.xpose.msra.mxu0 %v1277
        %1295 = vmatmul.f32.gmra.mxu0 %v1274
        %v1296 = vpop.f32.mrf.mxu0
        %v1297 = vadd.f32 %v1231, %v1296
        %1298 = vdwg.mxu0
        %v1300 = vsel %vm1246, %v818, 0
        %v1303 = vsel %vm1246, %v970, 0
        %1305 = vmatpush.xpose.msra.mxu0 0.0
        %1306 = vmatpush.xpose.msra.mxu0 0.0
        %1307 = vmatpush.xpose.msra.mxu0 0.0
        %1308 = vmatpush.xpose.msra.mxu0 0.0
        %1309 = vmatpush.xpose.msra.mxu0 0.0
        %1310 = vmatpush.xpose.msra.mxu0 0.0
        %1311 = vmatpush.xpose.msra.mxu0 0.0
        %1312 = vmatpush.xpose.msra.mxu0 0.0
        %1313 = vmatpush.xpose.msra.mxu0 0.0
        %1314 = vmatpush.xpose.msra.mxu0 0.0
        %1315 = vmatpush.xpose.msra.mxu0 0.0
        %1316 = vmatpush.xpose.msra.mxu0 0.0
        %1317 = vmatpush.xpose.msra.mxu0 0.0
        %1318 = vmatpush.xpose.msra.mxu0 0.0
        %1319 = vmatpush.xpose.msra.mxu0 0.0
        %1320 = vmatpush.xpose.msra.mxu0 %v1303
        %1321 = vmatmul.f32.gmra.mxu0 %v1300
        %v1322 = vpop.f32.mrf.mxu0
        %v1323 = vadd.f32 %v1232, %v1322
        %1324 = vdwg.mxu0
        %v1326 = vsel %vm1246, %v831, 0
        %v1329 = vsel %vm1246, %v983, 0
        %1331 = vmatpush.xpose.msra.mxu0 0.0
        %1332 = vmatpush.xpose.msra.mxu0 0.0
        %1333 = vmatpush.xpose.msra.mxu0 0.0
        %1334 = vmatpush.xpose.msra.mxu0 0.0
        %1335 = vmatpush.xpose.msra.mxu0 0.0
        %1336 = vmatpush.xpose.msra.mxu0 0.0
        %1337 = vmatpush.xpose.msra.mxu0 0.0
        %1338 = vmatpush.xpose.msra.mxu0 0.0
        %1339 = vmatpush.xpose.msra.mxu0 0.0
        %1340 = vmatpush.xpose.msra.mxu0 0.0
        %1341 = vmatpush.xpose.msra.mxu0 0.0
        %1342 = vmatpush.xpose.msra.mxu0 0.0
        %1343 = vmatpush.xpose.msra.mxu0 0.0
        %1344 = vmatpush.xpose.msra.mxu0 0.0
        %1345 = vmatpush.xpose.msra.mxu0 0.0
        %1346 = vmatpush.xpose.msra.mxu0 %v1329
        %1347 = vmatmul.f32.gmra.mxu0 %v1326
        %v1348 = vpop.f32.mrf.mxu0
        %v1349 = vadd.f32 %v1233, %v1348
        %1350 = vdwg.mxu0
        %v1352 = vsel %vm1246, %v856, 0
        %v1355 = vsel %vm1246, %v1008, 0
        %1357 = vmatpush.xpose.msra.mxu0 0.0
        %1358 = vmatpush.xpose.msra.mxu0 0.0
        %1359 = vmatpush.xpose.msra.mxu0 0.0
        %1360 = vmatpush.xpose.msra.mxu0 0.0
        %1361 = vmatpush.xpose.msra.mxu0 0.0
        %1362 = vmatpush.xpose.msra.mxu0 0.0
        %1363 = vmatpush.xpose.msra.mxu0 0.0
        %1364 = vmatpush.xpose.msra.mxu0 0.0
        %1365 = vmatpush.xpose.msra.mxu0 0.0
        %1366 = vmatpush.xpose.msra.mxu0 0.0
        %1367 = vmatpush.xpose.msra.mxu0 0.0
        %1368 = vmatpush.xpose.msra.mxu0 0.0
        %1369 = vmatpush.xpose.msra.mxu0 0.0
        %1370 = vmatpush.xpose.msra.mxu0 0.0
        %1371 = vmatpush.xpose.msra.mxu0 0.0
        %1372 = vmatpush.xpose.msra.mxu0 %v1355
        %1373 = vmatmul.f32.gmra.mxu0 %v1352
        %v1374 = vpop.f32.mrf.mxu0
        %v1375 = vadd.f32 %v1234, %v1374
        %1376 = vdwg.mxu0
        %v1378 = vsel %vm1246, %v869, 0
        %v1381 = vsel %vm1246, %v1021, 0
        %1383 = vmatpush.xpose.msra.mxu0 0.0
        %1384 = vmatpush.xpose.msra.mxu0 0.0
        %1385 = vmatpush.xpose.msra.mxu0 0.0
        %1386 = vmatpush.xpose.msra.mxu0 0.0
        %1387 = vmatpush.xpose.msra.mxu0 0.0
        %1388 = vmatpush.xpose.msra.mxu0 0.0
        %1389 = vmatpush.xpose.msra.mxu0 0.0
        %1390 = vmatpush.xpose.msra.mxu0 0.0
        %1391 = vmatpush.xpose.msra.mxu0 0.0
        %1392 = vmatpush.xpose.msra.mxu0 0.0
        %1393 = vmatpush.xpose.msra.mxu0 0.0
        %1394 = vmatpush.xpose.msra.mxu0 0.0
        %1395 = vmatpush.xpose.msra.mxu0 0.0
        %1396 = vmatpush.xpose.msra.mxu0 0.0
        %1397 = vmatpush.xpose.msra.mxu0 0.0
        %1398 = vmatpush.xpose.msra.mxu0 %v1381
        %1399 = vmatmul.f32.gmra.mxu0 %v1378
        %v1400 = vpop.f32.mrf.mxu0
        %v1401 = vadd.f32 %v1235, %v1400
        %1402 = vdwg.mxu0
        %v1404 = vsel %vm1246, %v894, 0
        %v1407 = vsel %vm1246, %v1046, 0
        %1409 = vmatpush.xpose.msra.mxu0 0.0
        %1410 = vmatpush.xpose.msra.mxu0 0.0
        %1411 = vmatpush.xpose.msra.mxu0 0.0
        %1412 = vmatpush.xpose.msra.mxu0 0.0
        %1413 = vmatpush.xpose.msra.mxu0 0.0
        %1414 = vmatpush.xpose.msra.mxu0 0.0
        %1415 = vmatpush.xpose.msra.mxu0 0.0
        %1416 = vmatpush.xpose.msra.mxu0 0.0
        %1417 = vmatpush.xpose.msra.mxu0 0.0
        %1418 = vmatpush.xpose.msra.mxu0 0.0
        %1419 = vmatpush.xpose.msra.mxu0 0.0
        %1420 = vmatpush.xpose.msra.mxu0 0.0
        %1421 = vmatpush.xpose.msra.mxu0 0.0
        %1422 = vmatpush.xpose.msra.mxu0 0.0
        %1423 = vmatpush.xpose.msra.mxu0 0.0
        %1424 = vmatpush.xpose.msra.mxu0 %v1407
        %1425 = vmatmul.f32.gmra.mxu0 %v1404
        %v1426 = vpop.f32.mrf.mxu0
        %v1427 = vadd.f32 %v1236, %v1426
        %1428 = vdwg.mxu0
        %v1430 = vsel %vm1246, %v907, 0
        %v1433 = vsel %vm1246, %v1059, 0
        %1435 = vmatpush.xpose.msra.mxu0 0.0
        %1436 = vmatpush.xpose.msra.mxu0 0.0
        %1437 = vmatpush.xpose.msra.mxu0 0.0
        %1438 = vmatpush.xpose.msra.mxu0 0.0
        %1439 = vmatpush.xpose.msra.mxu0 0.0
        %1440 = vmatpush.xpose.msra.mxu0 0.0
        %1441 = vmatpush.xpose.msra.mxu0 0.0
        %1442 = vmatpush.xpose.msra.mxu0 0.0
        %1443 = vmatpush.xpose.msra.mxu0 0.0
        %1444 = vmatpush.xpose.msra.mxu0 0.0
        %1445 = vmatpush.xpose.msra.mxu0 0.0
        %1446 = vmatpush.xpose.msra.mxu0 0.0
        %1447 = vmatpush.xpose.msra.mxu0 0.0
        %1448 = vmatpush.xpose.msra.mxu0 0.0
        %1449 = vmatpush.xpose.msra.mxu0 0.0
        %1450 = vmatpush.xpose.msra.mxu0 %v1433
        %1451 = vmatmul.f32.gmra.mxu0 %v1430
        %v1452 = vpop.f32.mrf.mxu0
        %v1453 = vadd.f32 %v1237, %v1452
        %1454 = vdwg.mxu0
        %v1455 = vsel %vm1246, %v1271, -inf
        %1456 = vmax.xlane.f32.xlu0 %v1455
        %v1457 = vpop.xlane.xlu0 %1456
        %v1458 = vsel %vm1246, %v1297, -inf
        %1459 = vmax.xlane.f32.xlu0 %v1458
        %v1460 = vpop.xlane.xlu0 %1459
        %v1461 = vsel %vm1246, %v1323, -inf
        %1462 = vmax.xlane.f32.xlu0 %v1461
        %v1463 = vpop.xlane.xlu0 %1462
        %v1464 = vsel %vm1246, %v1349, -inf
        %1465 = vmax.xlane.f32.xlu0 %v1464
        %v1466 = vpop.xlane.xlu0 %1465
        %v1467 = vsel %vm1246, %v1375, -inf
        %1468 = vmax.xlane.f32.xlu0 %v1467
        %v1469 = vpop.xlane.xlu0 %1468
        %v1470 = vsel %vm1246, %v1401, -inf
        %1471 = vmax.xlane.f32.xlu0 %v1470
        %v1472 = vpop.xlane.xlu0 %1471
        %v1473 = vsel %vm1246, %v1427, -inf
        %1474 = vmax.xlane.f32.xlu0 %v1473
        %v1475 = vpop.xlane.xlu0 %1474
        %v1476 = vsel %vm1246, %v1453, -inf
        %1477 = vmax.xlane.f32.xlu0 %v1476
        %v1478 = vpop.xlane.xlu0 %1477
        %v1479 = vsub.f32 %v1271, %v1457
        %v1480 = vsub.f32 %v1297, %v1460
        %v1481 = vsub.f32 %v1323, %v1463
        %v1482 = vsub.f32 %v1349, %v1466
        %v1483 = vsub.f32 %v1375, %v1469
        %v1484 = vsub.f32 %v1401, %v1472
        %v1485 = vsub.f32 %v1427, %v1475
        %v1486 = vsub.f32 %v1453, %v1478
        %v1487 = vmul.f32 %v1479, 1.442695
        %v1488 = vpow.pop %v1487
        %v1489 = vmul.f32 %v1480, 1.442695
        %v1490 = vpow.pop %v1489
        %v1491 = vmul.f32 %v1481, 1.442695
        %v1492 = vpow.pop %v1491
        %v1493 = vmul.f32 %v1482, 1.442695
        %v1494 = vpow.pop %v1493
        %v1495 = vmul.f32 %v1483, 1.442695
        %v1496 = vpow.pop %v1495
        %v1497 = vmul.f32 %v1484, 1.442695
        %v1498 = vpow.pop %v1497
        %v1499 = vmul.f32 %v1485, 1.442695
        %v1500 = vpow.pop %v1499
        %v1501 = vmul.f32 %v1486, 1.442695
        %v1502 = vpow.pop %v1501
        %v1503 = vsel %vm1246, %v1488, 0.0
        %1504 = vadd.xlane.f32.xlu0 %v1503
        %v1505 = vpop.xlane.xlu0 %1504
        %v1506 = vsel %vm1246, %v1490, 0.0
        %1507 = vadd.xlane.f32.xlu0 %v1506
        %v1508 = vpop.xlane.xlu0 %1507
        %v1509 = vsel %vm1246, %v1492, 0.0
        %1510 = vadd.xlane.f32.xlu0 %v1509
        %v1511 = vpop.xlane.xlu0 %1510
        %v1512 = vsel %vm1246, %v1494, 0.0
        %1513 = vadd.xlane.f32.xlu0 %v1512
        %v1514 = vpop.xlane.xlu0 %1513
        %v1515 = vsel %vm1246, %v1496, 0.0
        %1516 = vadd.xlane.f32.xlu0 %v1515
        %v1517 = vpop.xlane.xlu0 %1516
        %v1518 = vsel %vm1246, %v1498, 0.0
        %1519 = vadd.xlane.f32.xlu0 %v1518
        %v1520 = vpop.xlane.xlu0 %1519
        %v1521 = vsel %vm1246, %v1500, 0.0
        %1522 = vadd.xlane.f32.xlu0 %v1521
        %v1523 = vpop.xlane.xlu0 %1522
        %v1524 = vsel %vm1246, %v1502, 0.0
        %1525 = vadd.xlane.f32.xlu0 %v1524
        %v1526 = vpop.xlane.xlu0 %1525
        %v1527 = vrcp.pop %v1505
        %v1528 = vrcp.pop %v1508
        %v1529 = vrcp.pop %v1511
        %v1530 = vrcp.pop %v1514
        %v1531 = vrcp.pop %v1517
        %v1532 = vrcp.pop %v1520
        %v1533 = vrcp.pop %v1523
        %v1534 = vrcp.pop %v1526
        %v1535 = vmul.f32 %v1488, %v1527
        %v1536 = vmul.f32 %v1490, %v1528
        %v1537 = vmul.f32 %v1492, %v1529
        %v1538 = vmul.f32 %v1494, %v1530
        %v1539 = vmul.f32 %v1496, %v1531
        %v1540 = vmul.f32 %v1498, %v1532
        %v1541 = vmul.f32 %v1500, %v1533
        %v1542 = vmul.f32 %v1502, %v1534
        %v1544 = vsel %vm1246, %v1535, 0
        %1546 = vmatpush.msra.mxu0 0.0
        %1547 = vmatpush.msra.mxu0 0.0
        %1548 = vmatpush.msra.mxu0 0.0
        %1549 = vmatpush.msra.mxu0 0.0
        %1550 = vmatpush.msra.mxu0 0.0
        %1551 = vmatpush.msra.mxu0 0.0
        %1552 = vmatpush.msra.mxu0 0.0
        %1553 = vmatpush.msra.mxu0 0.0
        %1554 = vmatpush.msra.mxu0 0.0
        %1555 = vmatpush.msra.mxu0 0.0
        %1556 = vmatpush.msra.mxu0 0.0
        %1557 = vmatpush.msra.mxu0 0.0
        %1558 = vmatpush.msra.mxu0 0.0
        %1559 = vmatpush.msra.mxu0 0.0
        %1560 = vmatpush.msra.mxu0 0.0
        %1561 = vmatpush.msra.mxu0 %v1084
        %1562 = vmatmul.f32.gmra.mxu0 %v1544
        %v1563 = vpop.f32.mrf.mxu0
        %v1564 = vadd.f32 0.0, %v1563
        %1565 = vdwg.mxu0
        %v1567 = vsel %vm1246, %v1536, 0
        %1569 = vmatpush.msra.mxu0 0.0
        %1570 = vmatpush.msra.mxu0 0.0
        %1571 = vmatpush.msra.mxu0 0.0
        %1572 = vmatpush.msra.mxu0 0.0
        %1573 = vmatpush.msra.mxu0 0.0
        %1574 = vmatpush.msra.mxu0 0.0
        %1575 = vmatpush.msra.mxu0 0.0
        %1576 = vmatpush.msra.mxu0 0.0
        %1577 = vmatpush.msra.mxu0 0.0
        %1578 = vmatpush.msra.mxu0 0.0
        %1579 = vmatpush.msra.mxu0 0.0
        %1580 = vmatpush.msra.mxu0 0.0
        %1581 = vmatpush.msra.mxu0 0.0
        %1582 = vmatpush.msra.mxu0 0.0
        %1583 = vmatpush.msra.mxu0 0.0
        %1584 = vmatpush.msra.mxu0 %v1097
        %1585 = vmatmul.f32.gmra.mxu0 %v1567
        %v1586 = vpop.f32.mrf.mxu0
        %v1587 = vadd.f32 0.0, %v1586
        %1588 = vdwg.mxu0
        %v1590 = vsel %vm1246, %v1537, 0
        %1592 = vmatpush.msra.mxu0 0.0
        %1593 = vmatpush.msra.mxu0 0.0
        %1594 = vmatpush.msra.mxu0 0.0
        %1595 = vmatpush.msra.mxu0 0.0
        %1596 = vmatpush.msra.mxu0 0.0
        %1597 = vmatpush.msra.mxu0 0.0
        %1598 = vmatpush.msra.mxu0 0.0
        %1599 = vmatpush.msra.mxu0 0.0
        %1600 = vmatpush.msra.mxu0 0.0
        %1601 = vmatpush.msra.mxu0 0.0
        %1602 = vmatpush.msra.mxu0 0.0
        %1603 = vmatpush.msra.mxu0 0.0
        %1604 = vmatpush.msra.mxu0 0.0
        %1605 = vmatpush.msra.mxu0 0.0
        %1606 = vmatpush.msra.mxu0 0.0
        %1607 = vmatpush.msra.mxu0 %v1122
        %1608 = vmatmul.f32.gmra.mxu0 %v1590
        %v1609 = vpop.f32.mrf.mxu0
        %v1610 = vadd.f32 0.0, %v1609
        %1611 = vdwg.mxu0
        %v1613 = vsel %vm1246, %v1538, 0
        %1615 = vmatpush.msra.mxu0 0.0
        %1616 = vmatpush.msra.mxu0 0.0
        %1617 = vmatpush.msra.mxu0 0.0
        %1618 = vmatpush.msra.mxu0 0.0
        %1619 = vmatpush.msra.mxu0 0.0
        %1620 = vmatpush.msra.mxu0 0.0
        %1621 = vmatpush.msra.mxu0 0.0
        %1622 = vmatpush.msra.mxu0 0.0
        %1623 = vmatpush.msra.mxu0 0.0
        %1624 = vmatpush.msra.mxu0 0.0
        %1625 = vmatpush.msra.mxu0 0.0
        %1626 = vmatpush.msra.mxu0 0.0
        %1627 = vmatpush.msra.mxu0 0.0
        %1628 = vmatpush.msra.mxu0 0.0
        %1629 = vmatpush.msra.mxu0 0.0
        %1630 = vmatpush.msra.mxu0 %v1135
        %1631 = vmatmul.f32.gmra.mxu0 %v1613
        %v1632 = vpop.f32.mrf.mxu0
        %v1633 = vadd.f32 0.0, %v1632
        %1634 = vdwg.mxu0
        %v1636 = vsel %vm1246, %v1539, 0
        %1638 = vmatpush.msra.mxu0 0.0
        %1639 = vmatpush.msra.mxu0 0.0
        %1640 = vmatpush.msra.mxu0 0.0
        %1641 = vmatpush.msra.mxu0 0.0
        %1642 = vmatpush.msra.mxu0 0.0
        %1643 = vmatpush.msra.mxu0 0.0
        %1644 = vmatpush.msra.mxu0 0.0
        %1645 = vmatpush.msra.mxu0 0.0
        %1646 = vmatpush.msra.mxu0 0.0
        %1647 = vmatpush.msra.mxu0 0.0
        %1648 = vmatpush.msra.mxu0 0.0
        %1649 = vmatpush.msra.mxu0 0.0
        %1650 = vmatpush.msra.mxu0 0.0
        %1651 = vmatpush.msra.mxu0 0.0
        %1652 = vmatpush.msra.mxu0 0.0
        %1653 = vmatpush.msra.mxu0 %v1160
        %1654 = vmatmul.f32.gmra.mxu0 %v1636
        %v1655 = vpop.f32.mrf.mxu0
        %v1656 = vadd.f32 0.0, %v1655
        %1657 = vdwg.mxu0
        %v1659 = vsel %vm1246, %v1540, 0
        %1661 = vmatpush.msra.mxu0 0.0
        %1662 = vmatpush.msra.mxu0 0.0
        %1663 = vmatpush.msra.mxu0 0.0
        %1664 = vmatpush.msra.mxu0 0.0
        %1665 = vmatpush.msra.mxu0 0.0
        %1666 = vmatpush.msra.mxu0 0.0
        %1667 = vmatpush.msra.mxu0 0.0
        %1668 = vmatpush.msra.mxu0 0.0
        %1669 = vmatpush.msra.mxu0 0.0
        %1670 = vmatpush.msra.mxu0 0.0
        %1671 = vmatpush.msra.mxu0 0.0
        %1672 = vmatpush.msra.mxu0 0.0
        %1673 = vmatpush.msra.mxu0 0.0
        %1674 = vmatpush.msra.mxu0 0.0
        %1675 = vmatpush.msra.mxu0 0.0
        %1676 = vmatpush.msra.mxu0 %v1173
        %1677 = vmatmul.f32.gmra.mxu0 %v1659
        %v1678 = vpop.f32.mrf.mxu0
        %v1679 = vadd.f32 0.0, %v1678
        %1680 = vdwg.mxu0
        %v1682 = vsel %vm1246, %v1541, 0
        %1684 = vmatpush.msra.mxu0 0.0
        %1685 = vmatpush.msra.mxu0 0.0
        %1686 = vmatpush.msra.mxu0 0.0
        %1687 = vmatpush.msra.mxu0 0.0
        %1688 = vmatpush.msra.mxu0 0.0
        %1689 = vmatpush.msra.mxu0 0.0
        %1690 = vmatpush.msra.mxu0 0.0
        %1691 = vmatpush.msra.mxu0 0.0
        %1692 = vmatpush.msra.mxu0 0.0
        %1693 = vmatpush.msra.mxu0 0.0
        %1694 = vmatpush.msra.mxu0 0.0
        %1695 = vmatpush.msra.mxu0 0.0
        %1696 = vmatpush.msra.mxu0 0.0
        %1697 = vmatpush.msra.mxu0 0.0
        %1698 = vmatpush.msra.mxu0 0.0
        %1699 = vmatpush.msra.mxu0 %v1198
        %1700 = vmatmul.f32.gmra.mxu0 %v1682
        %v1701 = vpop.f32.mrf.mxu0
        %v1702 = vadd.f32 0.0, %v1701
        %1703 = vdwg.mxu0
        %v1705 = vsel %vm1246, %v1542, 0
        %1707 = vmatpush.msra.mxu0 0.0
        %1708 = vmatpush.msra.mxu0 0.0
        %1709 = vmatpush.msra.mxu0 0.0
        %1710 = vmatpush.msra.mxu0 0.0
        %1711 = vmatpush.msra.mxu0 0.0
        %1712 = vmatpush.msra.mxu0 0.0
        %1713 = vmatpush.msra.mxu0 0.0
        %1714 = vmatpush.msra.mxu0 0.0
        %1715 = vmatpush.msra.mxu0 0.0
        %1716 = vmatpush.msra.mxu0 0.0
        %1717 = vmatpush.msra.mxu0 0.0
        %1718 = vmatpush.msra.mxu0 0.0
        %1719 = vmatpush.msra.mxu0 0.0
        %1720 = vmatpush.msra.mxu0 0.0
        %1721 = vmatpush.msra.mxu0 0.0
        %1722 = vmatpush.msra.mxu0 %v1211
        %1723 = vmatmul.f32.gmra.mxu0 %v1705
        %v1724 = vpop.f32.mrf.mxu0
        %v1725 = vadd.f32 0.0, %v1724
        %1726 = vdwg.mxu0
        %v1727 = vld [vmem:[%s609] sm:$0xf]
        %v1728 = vld [vmem:[%s609 + $0x4] sm:$0xf]
        %v1729 = vld [vmem:[%s609 + $0x8] sm:$0xf]
        %v1730 = vld [vmem:[%s609 + $0xc] sm:$0xf]
        %v1731 = vpack.c.bf16 %v1564, %v1564
        %v1732 = vpack.c.bf16 %v1587, %v1587
        %v1733 = vpack.c.bf16 %v1610, %v1610
        %v1734 = vpack.c.bf16 %v1633, %v1633
        %v1735 = vpack.c.bf16 %v1656, %v1656
        %v1736 = vpack.c.bf16 %v1679, %v1679
        %v1737 = vpack.c.bf16 %v1702, %v1702
        %v1738 = vpack.c.bf16 %v1725, %v1725
        %v1740 = vsel %vm1246, %v1731, 0
        %vm1742 = vcmask 1043456
        %v1744 = vsel %vm1742, %v1727, 0
        %1746 = vmatpush.bf16.msra.mxu0 0
        %1747 = vmatpush.bf16.msra.mxu0 0
        %1748 = vmatpush.bf16.msra.mxu0 0
        %1749 = vmatpush.bf16.msra.mxu0 0
        %1750 = vmatpush.bf16.msra.mxu0 0
        %1751 = vmatpush.bf16.msra.mxu0 0
        %1752 = vmatpush.bf16.msra.mxu0 0
        %1753 = vmatpush.bf16.msra.mxu0 %v1744
        %1754 = vmatmul.bf16.gmra.mxu0 %v1740
        %v1755 = vpop.f32.mrf.mxu0
        %v1756 = vadd.f32 0.0, %v1755
        %v1757 = vpop.f32.mrf.mxu0
        %1758 = vdwg.mxu0
        %v1760 = vsel %vm1246, %v1732, 0
        %1762 = vmatpush.bf16.msra.mxu0 0
        %1763 = vmatpush.bf16.msra.mxu0 0
        %1764 = vmatpush.bf16.msra.mxu0 0
        %1765 = vmatpush.bf16.msra.mxu0 0
        %1766 = vmatpush.bf16.msra.mxu0 0
        %1767 = vmatpush.bf16.msra.mxu0 0
        %1768 = vmatpush.bf16.msra.mxu0 0
        %1769 = vmatpush.bf16.msra.mxu0 %v1744
        %1770 = vmatmul.bf16.gmra.mxu0 %v1760
        %v1771 = vpop.f32.mrf.mxu0
        %v1772 = vadd.f32 0.0, %v1771
        %v1773 = vpop.f32.mrf.mxu0
        %1774 = vdwg.mxu0
        %v1776 = vsel %vm1246, %v1733, 0
        %v1779 = vsel %vm1742, %v1728, 0
        %1781 = vmatpush.bf16.msra.mxu0 0
        %1782 = vmatpush.bf16.msra.mxu0 0
        %1783 = vmatpush.bf16.msra.mxu0 0
        %1784 = vmatpush.bf16.msra.mxu0 0
        %1785 = vmatpush.bf16.msra.mxu0 0
        %1786 = vmatpush.bf16.msra.mxu0 0
        %1787 = vmatpush.bf16.msra.mxu0 0
        %1788 = vmatpush.bf16.msra.mxu0 %v1779
        %1789 = vmatmul.bf16.gmra.mxu0 %v1776
        %v1790 = vpop.f32.mrf.mxu0
        %v1791 = vadd.f32 0.0, %v1790
        %v1792 = vpop.f32.mrf.mxu0
        %1793 = vdwg.mxu0
        %v1795 = vsel %vm1246, %v1734, 0
        %1797 = vmatpush.bf16.msra.mxu0 0
        %1798 = vmatpush.bf16.msra.mxu0 0
        %1799 = vmatpush.bf16.msra.mxu0 0
        %1800 = vmatpush.bf16.msra.mxu0 0
        %1801 = vmatpush.bf16.msra.mxu0 0
        %1802 = vmatpush.bf16.msra.mxu0 0
        %1803 = vmatpush.bf16.msra.mxu0 0
        %1804 = vmatpush.bf16.msra.mxu0 %v1779
        %1805 = vmatmul.bf16.gmra.mxu0 %v1795
        %v1806 = vpop.f32.mrf.mxu0
        %v1807 = vadd.f32 0.0, %v1806
        %v1808 = vpop.f32.mrf.mxu0
        %1809 = vdwg.mxu0
        %v1811 = vsel %vm1246, %v1735, 0
        %v1814 = vsel %vm1742, %v1729, 0
        %1816 = vmatpush.bf16.msra.mxu0 0
        %1817 = vmatpush.bf16.msra.mxu0 0
        %1818 = vmatpush.bf16.msra.mxu0 0
        %1819 = vmatpush.bf16.msra.mxu0 0
        %1820 = vmatpush.bf16.msra.mxu0 0
        %1821 = vmatpush.bf16.msra.mxu0 0
        %1822 = vmatpush.bf16.msra.mxu0 0
        %1823 = vmatpush.bf16.msra.mxu0 %v1814
        %1824 = vmatmul.bf16.gmra.mxu0 %v1811
        %v1825 = vpop.f32.mrf.mxu0
        %v1826 = vadd.f32 0.0, %v1825
        %v1827 = vpop.f32.mrf.mxu0
        %1828 = vdwg.mxu0
        %v1830 = vsel %vm1246, %v1736, 0
        %1832 = vmatpush.bf16.msra.mxu0 0
        %1833 = vmatpush.bf16.msra.mxu0 0
        %1834 = vmatpush.bf16.msra.mxu0 0
        %1835 = vmatpush.bf16.msra.mxu0 0
        %1836 = vmatpush.bf16.msra.mxu0 0
        %1837 = vmatpush.bf16.msra.mxu0 0
        %1838 = vmatpush.bf16.msra.mxu0 0
        %1839 = vmatpush.bf16.msra.mxu0 %v1814
        %1840 = vmatmul.bf16.gmra.mxu0 %v1830
        %v1841 = vpop.f32.mrf.mxu0
        %v1842 = vadd.f32 0.0, %v1841
        %v1843 = vpop.f32.mrf.mxu0
        %1844 = vdwg.mxu0
        %v1846 = vsel %vm1246, %v1737, 0
        %v1849 = vsel %vm1742, %v1730, 0
        %1851 = vmatpush.bf16.msra.mxu0 0
        %1852 = vmatpush.bf16.msra.mxu0 0
        %1853 = vmatpush.bf16.msra.mxu0 0
        %1854 = vmatpush.bf16.msra.mxu0 0
        %1855 = vmatpush.bf16.msra.mxu0 0
        %1856 = vmatpush.bf16.msra.mxu0 0
        %1857 = vmatpush.bf16.msra.mxu0 0
        %1858 = vmatpush.bf16.msra.mxu0 %v1849
        %1859 = vmatmul.bf16.gmra.mxu0 %v1846
        %v1860 = vpop.f32.mrf.mxu0
        %v1861 = vadd.f32 0.0, %v1860
        %v1862 = vpop.f32.mrf.mxu0
        %1863 = vdwg.mxu0
        %v1865 = vsel %vm1246, %v1738, 0
        %1867 = vmatpush.bf16.msra.mxu0 0
        %1868 = vmatpush.bf16.msra.mxu0 0
        %1869 = vmatpush.bf16.msra.mxu0 0
        %1870 = vmatpush.bf16.msra.mxu0 0
        %1871 = vmatpush.bf16.msra.mxu0 0
        %1872 = vmatpush.bf16.msra.mxu0 0
        %1873 = vmatpush.bf16.msra.mxu0 0
        %1874 = vmatpush.bf16.msra.mxu0 %v1849
        %1875 = vmatmul.bf16.gmra.mxu0 %v1865
        %v1876 = vpop.f32.mrf.mxu0
        %v1877 = vadd.f32 0.0, %v1876
        %v1878 = vpop.f32.mrf.mxu0
        %1879 = vdwg.mxu0
        %v1880 = vsel %vm763, %v1756, 0.0
        %v1881 = vsel %vm763, %v1791, 0.0
        %v1882 = vadd.f32 %v1880, %v1881
        %v1883 = vsel %vm763, %v1826, 0.0
        %v1884 = vadd.f32 %v1882, %v1883
        %v1885 = vsel %vm763, %v1861, 0.0
        %v1886 = vadd.f32 %v1884, %v1885
        %v1887 = vsel %vm763, %v1772, 0.0
        %v1888 = vsel %vm763, %v1807, 0.0
        %v1889 = vadd.f32 %v1887, %v1888
        %v1890 = vsel %vm763, %v1842, 0.0
        %v1891 = vadd.f32 %v1889, %v1890
        %v1892 = vsel %vm763, %v1877, 0.0
        %v1893 = vadd.f32 %v1891, %v1892
        %v1894 = vld [vmem:[%s612] sm:$0x1]
        %v1896 = vperm.slane %v1894, 0
        %v1898 = vadd.f32 %v1886, %v1896
        %v1899 = vadd.f32 %v1893, %v1896
        %v1900 = vadd.f32 %v1898, %v651
        %v1901 = vadd.f32 %v1899, %v652
        %v1902 = vld [vmem:[%s615] sm:$0x1]
        %v1903 = vld [vmem:[%s618] sm:$0x1]
        %v1904 = vsel %vm763, %v1900, 0.0
        %1905 = vadd.xlane.f32.xlu0 %v1904
        %v1906 = vpop.xlane.xlu0 %1905
        %v1907 = vsel %vm763, %v1901, 0.0
        %1908 = vadd.xlane.f32.xlu0 %v1907
        %v1909 = vpop.xlane.xlu0 %1908
        %v1910 = vrcp.pop 32.0
        %v1911 = vmul.f32 32.0, %v1910
        %v1912 = vsub.f32 1.0, %v1911
        %v1913 = vmul.f32 %v1910, %v1912
        %v1914 = vadd.f32 %v1910, %v1913
        %vm1915 = vweird.f32 %v1910
        %v1916 = vsel %vm1915, %v1910, %v1914
        %v1917 = vmul.f32 %v1906, %v1916
        %v1918 = vmul.f32 %v1909, %v1916
        %v1919 = vsub.f32 %v1900, %v1917
        %v1920 = vsub.f32 %v1901, %v1918
        %v1921 = vmul.f32 %v1919, %v1919
        %v1922 = vmul.f32 %v1920, %v1920
        %v1923 = vsel %vm763, %v1921, 0.0
        %1924 = vadd.xlane.f32.xlu0 %v1923
        %v1925 = vpop.xlane.xlu0 %1924
        %v1926 = vsel %vm763, %v1922, 0.0
        %1927 = vadd.xlane.f32.xlu0 %v1926
        %v1928 = vpop.xlane.xlu0 %1927
        %v1929 = vmul.f32 %v1925, %v1916
        %v1930 = vmul.f32 %v1928, %v1916
        %v1931 = vadd.f32 %v1929, 1e-05
        %v1932 = vadd.f32 %v1930, 1e-05
        %v1933 = vrsqrt.pop %v1931
        %v1934 = vmul.f32 %v1933, %v1931
        %v1935 = vmul.f32 %v1934, %v1933
        %v1936 = vmul.f32 0.5, %v1935
        %v1937 = vsub.f32 1.5, %v1936
        %v1938 = vmul.f32 %v1933, %v1937
        %vm1939 = vweird.f32 %v1931
        %vm1940 = vweird.f32 %v1933
        %vm1941 = vmor %vm1939, %vm1940
        %v1942 = vsel %vm1941, %v1933, %v1938
        %v1943 = vrsqrt.pop %v1932
        %v1944 = vmul.f32 %v1943, %v1932
        %v1945 = vmul.f32 %v1944, %v1943
        %v1946 = vmul.f32 0.5, %v1945
        %v1947 = vsub.f32 1.5, %v1946
        %v1948 = vmul.f32 %v1943, %v1947
        %vm1949 = vweird.f32 %v1932
        %vm1950 = vweird.f32 %v1943
        %vm1951 = vmor %vm1949, %vm1950
        %v1952 = vsel %vm1951, %v1943, %v1948
        %v1953 = vmul.f32 %v1919, %v1942
        %v1954 = vmul.f32 %v1920, %v1952
        %v1956 = vperm.slane %v1902, 0
        %v1958 = vmul.f32 %v1953, %v1956
        %v1959 = vmul.f32 %v1954, %v1956
        %v1961 = vperm.slane %v1903, 0
        %v1963 = vadd.f32 %v1958, %v1961
        %v1964 = vadd.f32 %v1959, %v1961
        %v1965 = vpack.c.bf16 %v1964, %v1963
        %v1966 = vld [vmem:[%s623] sm:$0xf]
        %v1967 = vld [vmem:[%s623 + $0x4] sm:$0xf]
        %v1968 = vld [vmem:[%s623 + $0x8] sm:$0xf]
        %v1969 = vld [vmem:[%s623 + $0xc] sm:$0xf]
        %v1970 = vld [vmem:[%s626] sm:$0x1]
        %v1972 = vperm.slane %v1970, 0
        %v1978 = vunpack.c.l.b16 %v1966
        %v1979 = vunpack.c.l.b16 %v1967
        %v1980 = vunpack.c.l.b16 %v1968
        %v1981 = vunpack.c.l.b16 %v1969
        %v1982 = vpack.c.b16 %v1979, %v1978
        %v1983 = vpack.c.b16 %v1981, %v1980
        %v1987 = vsel %vm763, %v1965, 0
        %1989 = vmatpush.bf16.msra.mxu0 0
        %1990 = vmatpush.bf16.msra.mxu0 0
        %1991 = vmatpush.bf16.msra.mxu0 0
        %1992 = vmatpush.bf16.msra.mxu0 0
        %1993 = vmatpush.bf16.msra.mxu0 0
        %1994 = vmatpush.bf16.msra.mxu0 0
        %1995 = vmatpush.bf16.msra.mxu0 %v1983
        %1996 = vmatpush.bf16.msra.mxu0 %v1982
        %1997 = vmatmul.bf16.gmra.mxu0 %v1987
        %v1998 = vpop.f32.mrf.mxu0
        %v1999 = vadd.f32 %v1972, %v1998
        %v2000 = vpop.f32.mrf.mxu0
        %v2001 = vadd.f32 %v1972, %v2000
        %2002 = vdwg.mxu0
        %v2003 = vmax.f32 %v1999, 0.0
        %v2004 = vmax.f32 %v2001, 0.0
        %v2005 = vpack.c.bf16 %v2004, %v2003
        %v2006 = vld [vmem:[%s631] sm:$0xf]
        %v2007 = vld [vmem:[%s631 + $0x4] sm:$0xf]
        %v2008 = vld [vmem:[%s631 + $0x8] sm:$0xf]
        %v2009 = vld [vmem:[%s631 + $0xc] sm:$0xf]
        %v2010 = vld [vmem:[%s631 + $0x10] sm:$0xf]
        %v2011 = vld [vmem:[%s631 + $0x14] sm:$0xf]
        %v2012 = vld [vmem:[%s631 + $0x18] sm:$0xf]
        %v2013 = vld [vmem:[%s631 + $0x1c] sm:$0xf]
        %v2014 = vld [vmem:[%s634] sm:$0x1]
        %v2016 = vperm.slane %v2014, 0
        %v2026 = vunpack.c.l.b16 %v2006
        %v2027 = vunpack.c.l.b16 %v2007
        %v2028 = vunpack.c.l.b16 %v2008
        %v2029 = vunpack.c.l.b16 %v2009
        %v2030 = vunpack.c.l.b16 %v2010
        %v2031 = vunpack.c.l.b16 %v2011
        %v2032 = vunpack.c.l.b16 %v2012
        %v2033 = vunpack.c.l.b16 %v2013
        %v2034 = vpack.c.b16 %v2027, %v2026
        %v2035 = vpack.c.b16 %v2029, %v2028
        %v2036 = vpack.c.b16 %v2031, %v2030
        %v2037 = vpack.c.b16 %v2033, %v2032
        %vm2042 = vcmask 523264
        %v2044 = vsel %vm2042, %v2005, 0
        %2046 = vmatpush.bf16.msra.mxu0 0
        %2047 = vmatpush.bf16.msra.mxu0 0
        %2048 = vmatpush.bf16.msra.mxu0 0
        %2049 = vmatpush.bf16.msra.mxu0 0
        %2050 = vmatpush.bf16.msra.mxu0 %v2037
        %2051 = vmatpush.bf16.msra.mxu0 %v2036
        %2052 = vmatpush.bf16.msra.mxu0 %v2035
        %2053 = vmatpush.bf16.msra.mxu0 %v2034
        %2054 = vmatmul.bf16.gmra.mxu0 %v2044
        %v2055 = vpop.f32.mrf.mxu0
        %v2056 = vadd.f32 %v2016, %v2055
        %v2057 = vpop.f32.mrf.mxu0
        %v2058 = vadd.f32 %v2016, %v2057
        %2059 = vdwg.mxu0
        %v2060 = vadd.f32 %v2056, %v1963
        %v2061 = vadd.f32 %v2058, %v1964
        %v2062 = vld [vmem:[%s637] sm:$0x1]
        %v2063 = vld [vmem:[%s640] sm:$0x1]
        %v2064 = vsel %vm763, %v2060, 0.0
        %2065 = vadd.xlane.f32.xlu0 %v2064
        %v2066 = vpop.xlane.xlu0 %2065
        %v2067 = vsel %vm763, %v2061, 0.0
        %2068 = vadd.xlane.f32.xlu0 %v2067
        %v2069 = vpop.xlane.xlu0 %2068
        %v2070 = vmul.f32 %v2066, %v1916
        %v2071 = vmul.f32 %v2069, %v1916
        %v2072 = vsub.f32 %v2060, %v2070
        %v2073 = vsub.f32 %v2061, %v2071
        %v2074 = vmul.f32 %v2072, %v2072
        %v2075 = vmul.f32 %v2073, %v2073
        %v2076 = vsel %vm763, %v2074, 0.0
        %2077 = vadd.xlane.f32.xlu0 %v2076
        %v2078 = vpop.xlane.xlu0 %2077
        %v2079 = vsel %vm763, %v2075, 0.0
        %2080 = vadd.xlane.f32.xlu0 %v2079
        %v2081 = vpop.xlane.xlu0 %2080
        %v2082 = vmul.f32 %v2078, %v1916
        %v2083 = vmul.f32 %v2081, %v1916
        %v2084 = vadd.f32 %v2082, 1e-05
        %v2085 = vadd.f32 %v2083, 1e-05
        %v2086 = vrsqrt.pop %v2084
        %v2087 = vmul.f32 %v2086, %v2084
        %v2088 = vmul.f32 %v2087, %v2086
        %v2089 = vmul.f32 0.5, %v2088
        %v2090 = vsub.f32 1.5, %v2089
        %v2091 = vmul.f32 %v2086, %v2090
        %vm2092 = vweird.f32 %v2084
        %vm2093 = vweird.f32 %v2086
        %vm2094 = vmor %vm2092, %vm2093
        %v2095 = vsel %vm2094, %v2086, %v2091
        %v2096 = vrsqrt.pop %v2085
        %v2097 = vmul.f32 %v2096, %v2085
        %v2098 = vmul.f32 %v2097, %v2096
        %v2099 = vmul.f32 0.5, %v2098
        %v2100 = vsub.f32 1.5, %v2099
        %v2101 = vmul.f32 %v2096, %v2100
        %vm2102 = vweird.f32 %v2085
        %vm2103 = vweird.f32 %v2096
        %vm2104 = vmor %vm2102, %vm2103
        %v2105 = vsel %vm2104, %v2096, %v2101
        %v2106 = vmul.f32 %v2072, %v2095
        %v2107 = vmul.f32 %v2073, %v2105
        %v2109 = vperm.slane %v2062, 0
        %v2111 = vmul.f32 %v2106, %v2109
        %v2112 = vmul.f32 %v2107, %v2109
        %v2114 = vperm.slane %v2063, 0
        %v2116 = vadd.f32 %v2111, %v2114
        %v2117 = vadd.f32 %v2112, %v2114
        %2118 = vst.msk [vmem:[#allocation2] sm:$0xff] %vm763, %v2116
        %2119 = vst.msk [vmem:[#allocation2 + $0x8] sm:$0xff] %vm763, %v2117
        %2120 = vst.msk [vmem:[%s595] sm:$0xff] %vm763, %v2116
        %2121 = vst.msk [vmem:[%s595 + $0x8] sm:$0xff] %vm763, %v2117
        %s2122 = sand.u32 %s390, 1
        %s2123 = scalar_lea.sflag [#allocation4], %s2122
        %s2124 = sand.u32 %s390, 1
        %s2125 = smul.addr %s2124, 16
        %s2126 = scalar_lea.vmem [#allocation3], %s2125
        // Predicated region
        $region81: #{tpu_custom_call.1} parent=75 // pred_check
          %p2127 = pneg %p400
        $region82: #{tpu_custom_call.1} parent=75 // pred_check_branch
          %2129 = sbr.rel (%p2127) target = $region84
        $region83: #{tpu_custom_call.1} parent=75 // pred_region
          %2131 = vsyncadd %s2123, 0
          %s2132 = smul.addr %s28, 2
          %s2133 = smul.addr %s2132, 8
          %s2134 = scalar_lea.hbm %s14, %s2133
          %s2135 = sshll.u32 %s2126, 4
          %s2136 = int_to_ptr.vmem [resolvable:$true] %s2135
          %s2137 = sshll.u32 %s2134, 4
          %s2138 = int_to_ptr.hbm [resolvable:$true] %s2137
          %2143 = dma.vmem_to_hbm [thread:$0]  %s2136, 256, %s2138, %s2123, 128, 128, 8
        $region84: #{tpu_custom_call.1} parent=75 // pred_fallthru
          _
      $region76: #{tpu_custom_call.1} parent=5 // pred_fallthru
        _
      %p2144 = scmp.le.s32.totalorder 2, %s23
      // Predicated region
      $region85: #{tpu_custom_call.1} parent=5 // pred_check
        %p2145 = pneg %p2144
      $region86: #{tpu_custom_call.1} parent=5 // pred_check_branch
        %2147 = sbr.rel (%p2145) target = $region88
      $region87: #{tpu_custom_call.1} parent=5 // pred_region
        %s2148 = ssub.s32 %s23, 2
        // Predicated region
        $region89: #{tpu_custom_call.1} parent=87 // pred_check
          %p2149 = pneg %p406
        $region90: #{tpu_custom_call.1} parent=87 // pred_check_branch
          %2151 = sbr.rel (%p2149) target = $region92
        $region91: #{tpu_custom_call.1} parent=87 // pred_region
          %s2152 = sand.u32 %s391, 1
          %s2153 = scalar_lea.sflag [#allocation4], %s2152
          %s2154 = sand.u32 %s391, 1
          %s2155 = smul.addr %s2154, 16
          %s2156 = scalar_lea.vmem [#allocation3], %s2155
          %2158 = dma.done %s2153, 256
        $region92: #{tpu_custom_call.1} parent=87 // pred_fallthru
          _
      $region88: #{tpu_custom_call.1} parent=5 // pred_fallthru
        _
    $region6: #{tpu_custom_call.1} parent=1 // loop_footer
      %s27 = sadd.s32 1, %s23
    $region7: #{tpu_custom_call.1} parent=1 // loop_footer_branch
      %22 = sbr.rel target = $region3
    $region8: #{tpu_custom_call.1} parent=1 // loop_exit
      _
    %2159 = vsyncpa [#allocation4], 1
    %s2160 = scalar_lea.sflag [#allocation4], 1
    %2161 = vsyncpa %s2160, 1

</llo_original>
